<compile_context>
chip_gen: v5e
topology: v5e:2x2
jax: 0.10.0
libtpu: 0.0.40
codegen_flags: <defaults>
</compile_context>

<pallas_src>
import jax
import jax.numpy as jnp
from jax.experimental import pallas as pl
from jax.experimental.pallas import tpu as pltpu  # noqa: F401  (TPU backend module)

HIDDEN = 32          # hidden_size
OUTPUT = 16          # output_size (vocab)
FUSED = 4 * HIDDEN   # fused gate width: [r | z | gi_n | gh_n] = 128 lanes for H=32
OPAD = 128           # lane-padded output width (>= OUTPUT, multiple of 128)


def decoder_kernel(x_ref,                 # (T, H)   relu-input embedding rows (pre-gathered)
                   h0_ref,                # (1, H)   initial hidden
                   w_f_ref, b_f_ref,      # (2H, 4H), (1, 4H) fused gate weights / biases
                   w_out_ref, b_out_ref,  # (H, OPAD), (1, OPAD) padded projection
                   logp_ref, h_out_ref):  # outputs: (T, OPAD), (1, H)
    T = x_ref.shape[0]

    # Weights loaded once, resident in vregs/VMEM for all steps.
    w_f = w_f_ref[...]
    b_f = b_f_ref[...]
    w_out = w_out_ref[...]
    b_out = b_out_ref[...]

    h = h0_ref[...]                                   # (1, H) carried in registers
    rows = []
    for t in range(T):                                # static trip count -> fully unrolled
        x = jnp.maximum(x_ref[t:t + 1, :], 0.0)       # relu(embedding(input))   (1, H)
        xh = jnp.concatenate([x, h], axis=1)          # (1, 2H)

        # One fused MXU push per step; bias already includes b_i + b_h for r/z.
        g = jnp.dot(xh, w_f, preferred_element_type=jnp.float32) + b_f   # (1, 4H)

        # PyTorch nn.GRU gate order: r, z, n.
        r = jax.nn.sigmoid(g[:, 0:HIDDEN])
        z = jax.nn.sigmoid(g[:, HIDDEN:2 * HIDDEN])
        n = jnp.tanh(g[:, 2 * HIDDEN:3 * HIDDEN] + r * g[:, 3 * HIDDEN:4 * HIDDEN])
        h = (1.0 - z) * n + z * h

        # Linear(H, O) + LogSoftmax over the lane-padded width (pads -> exp(-huge) = 0).
        logits = jnp.dot(h, w_out, preferred_element_type=jnp.float32) + b_out
        m = jnp.max(logits, axis=-1, keepdims=True)
        lse = jnp.log(jnp.sum(jnp.exp(logits - m), axis=-1, keepdims=True)) + m
        rows.append(logits - lse)

    logp_ref[...] = jnp.concatenate(rows, axis=0)     # single (T, 128) tile store
    h_out_ref[...] = h                                # final hidden written once


def make_params(key):
    """Deterministic parameters mimicking PyTorch's default uniform init."""
    bound = 1.0 / jnp.sqrt(jnp.float32(HIDDEN))
    keys = jax.random.split(key, 16)
    u = lambda k, shape: jax.random.uniform(k, shape, jnp.float32, -bound, bound)
    return {
        "emb":   jax.random.normal(keys[0], (OUTPUT, HIDDEN), jnp.float32),
        # GRU weights stored transposed: (in, out)
        "w_ir": u(keys[1], (HIDDEN, HIDDEN)), "w_iz": u(keys[2], (HIDDEN, HIDDEN)),
        "w_in": u(keys[3], (HIDDEN, HIDDEN)), "w_hr": u(keys[4], (HIDDEN, HIDDEN)),
        "w_hz": u(keys[5], (HIDDEN, HIDDEN)), "w_hn": u(keys[6], (HIDDEN, HIDDEN)),
        "b_ir": u(keys[7], (1, HIDDEN)), "b_iz": u(keys[8], (1, HIDDEN)),
        "b_in": u(keys[9], (1, HIDDEN)), "b_hr": u(keys[10], (1, HIDDEN)),
        "b_hz": u(keys[11], (1, HIDDEN)), "b_hn": u(keys[12], (1, HIDDEN)),
        # Linear stored transposed: (H, O)
        "w_out": u(keys[13], (HIDDEN, OUTPUT)), "b_out": u(keys[14], (1, OUTPUT)),
    }


def fuse_params(params):
    """Pack per-gate params into the slabs the kernel consumes.

    Fused gate slab W_f (2H, 4H), LHS = [x, h]:
      cols 0:H   -> x@w_ir + h@w_hr           (r pre-activation)
      cols H:2H  -> x@w_iz + h@w_hz           (z pre-activation)
      cols 2H:3H -> x@w_in                    (gi_n)
      cols 3H:4H -> h@w_hn                    (gh_n)
    """
    zero = jnp.zeros((HIDDEN, HIDDEN), jnp.float32)
    top = jnp.concatenate([params["w_ir"], params["w_iz"], params["w_in"], zero], axis=1)
    bot = jnp.concatenate([params["w_hr"], params["w_hz"], zero, params["w_hn"]], axis=1)
    w_f = jnp.concatenate([top, bot], axis=0)                                  # (2H, 4H)
    b_f = jnp.concatenate([params["b_ir"] + params["b_hr"],
                           params["b_iz"] + params["b_hz"],
                           params["b_in"], params["b_hn"]], axis=1)            # (1, 4H)
    # Lane-pad the projection to 128; padded logits get -1e30 so they vanish in logsumexp.
    w_out = jnp.zeros((HIDDEN, OPAD), jnp.float32).at[:, :OUTPUT].set(params["w_out"])
    b_out = jnp.full((1, OPAD), -1e30, jnp.float32).at[:, :OUTPUT].set(params["b_out"])
    return w_f, b_f, w_out, b_out


def decoder_forward(tokens, hidden, params):
    """tokens: int32 (T,); hidden: f32 (1,1,H). Returns (log_probs (T,O), hidden (1,1,H)).
    Each step t is exactly one PyTorch Decoder.forward(tokens[t], hidden) call."""
    T = tokens.shape[0]
    w_f, b_f, w_out_pad, b_out_pad = fuse_params(params)
    h0 = hidden.reshape(1, HIDDEN)

    ids = jnp.clip(tokens.astype(jnp.int32), 0, OUTPUT - 1)   # no silent OOB reads
    x_rows = jnp.take(params["emb"], ids, axis=0)             # bulk gather: (T, H)

    logp_pad, h_out = pl.pallas_call(
        decoder_kernel,
        # No grid: single invocation, whole arrays resident in VMEM (≈50 KB total),
        # one input DMA set and one output DMA set for the entire T-step decode.
        out_shape=(jax.ShapeDtypeStruct((T, OPAD), jnp.float32),
                   jax.ShapeDtypeStruct((1, HIDDEN), jnp.float32)),
    )(x_rows, h0, w_f, b_f, w_out_pad, b_out_pad)

    return logp_pad[:, :OUTPUT], h_out.reshape(1, 1, HIDDEN)


def decoder_reference(tokens, hidden, params):
    """Pure-JAX reference: T independent single-step Decoder.forward calls."""
    h = hidden.reshape(1, HIDDEN)
    outs = []
    for t in range(tokens.shape[0]):
        x = jnp.maximum(params["emb"][tokens[t]][None, :], 0.0)
        r = jax.nn.sigmoid(x @ params["w_ir"] + params["b_ir"] + h @ params["w_hr"] + params["b_hr"])
        z = jax.nn.sigmoid(x @ params["w_iz"] + params["b_iz"] + h @ params["w_hz"] + params["b_hz"])
        n = jnp.tanh(x @ params["w_in"] + params["b_in"] + r * (h @ params["w_hn"] + params["b_hn"]))
        h = (1.0 - z) * n + z * h
        logits = h @ params["w_out"] + params["b_out"]
        outs.append(logits - jax.scipy.special.logsumexp(logits, axis=1, keepdims=True))
    return jnp.concatenate(outs, axis=0), h.reshape(1, 1, HIDDEN)


if __name__ == "__main__":
    key = jax.random.PRNGKey(0)
    pkey, hkey, tkey = jax.random.split(key, 3)
    params = make_params(pkey)

    T = 8                                                               # fused decode steps
    tokens = jax.random.randint(tkey, (T,), 0, OUTPUT, dtype=jnp.int32)
    hidden = jax.random.normal(hkey, (1, 1, HIDDEN), jnp.float32)       # previous GRU hidden

    logp, h_new = decoder_forward(tokens, hidden, params)
    jax.block_until_ready((logp, h_new))

    ref_logp, ref_h = decoder_reference(tokens, hidden, params)
    assert logp.shape == (T, OUTPUT) and h_new.shape == (1, 1, HIDDEN)
    assert jnp.allclose(logp, ref_logp, atol=1e-5, rtol=1e-5)
    assert jnp.allclose(h_new, ref_h, atol=1e-5, rtol=1e-5)

    print("KERNEL_OK")
</pallas_src>

<mosaic_0001>
module attributes {stable_mosaic.version = 11 : i64} {
  func.func @decoder_kernel(%arg0: memref<8x32xf32, #tpu.memory_space<vmem>>, %arg1: memref<1x32xf32, #tpu.memory_space<vmem>>, %arg2: memref<64x128xf32, #tpu.memory_space<vmem>>, %arg3: memref<1x128xf32, #tpu.memory_space<vmem>>, %arg4: memref<32x128xf32, #tpu.memory_space<vmem>>, %arg5: memref<1x128xf32, #tpu.memory_space<vmem>>, %arg6: memref<8x128xf32, #tpu.memory_space<vmem>>, %arg7: memref<1x32xf32, #tpu.memory_space<vmem>>) attributes {dimension_semantics = [], scalar_prefetch = 0 : i64, scratch_operands = 0 : i64, tpu.core_type = #tpu.core_type<tc>} {
    %c0 = arith.constant 0 : index
    %c0_0 = arith.constant 0 : index
    %0 = vector.load %arg2[%c0, %c0_0] : memref<64x128xf32, #tpu.memory_space<vmem>>, vector<64x128xf32>
    %c0_1 = arith.constant 0 : index
    %c0_2 = arith.constant 0 : index
    %1 = vector.load %arg3[%c0_1, %c0_2] : memref<1x128xf32, #tpu.memory_space<vmem>>, vector<1x128xf32>
    %c0_3 = arith.constant 0 : index
    %c0_4 = arith.constant 0 : index
    %2 = vector.load %arg4[%c0_3, %c0_4] : memref<32x128xf32, #tpu.memory_space<vmem>>, vector<32x128xf32>
    %c0_5 = arith.constant 0 : index
    %c0_6 = arith.constant 0 : index
    %3 = vector.load %arg5[%c0_5, %c0_6] : memref<1x128xf32, #tpu.memory_space<vmem>>, vector<1x128xf32>
    %c0_7 = arith.constant 0 : index
    %c0_8 = arith.constant 0 : index
    %4 = vector.load %arg1[%c0_7, %c0_8] : memref<1x32xf32, #tpu.memory_space<vmem>>, vector<1x32xf32>
    %c0_9 = arith.constant 0 : index
    %c0_10 = arith.constant 0 : index
    %5 = vector.load %arg0[%c0_9, %c0_10] : memref<8x32xf32, #tpu.memory_space<vmem>>, vector<1x32xf32>
    %cst = arith.constant 0.000000e+00 : f32
    %6 = vector.broadcast %cst : f32 to vector<1x32xf32>
    %7 = arith.maximumf %5, %6 : vector<1x32xf32>
    %8 = tpu.concatenate %7, %4 in 1 : vector<1x32xf32>, vector<1x32xf32> -> vector<1x64xf32>
    %cst_11 = arith.constant dense<0.000000e+00> : vector<1x128xf32>
    %9 = tpu.matmul %8, %0, %cst_11 {dimension_numbers = #tpu.dot_dimension_numbers<[1], [0], [0], [1], [0, 0, 1, 1], [], []>} : vector<1x64xf32>, vector<64x128xf32>, vector<1x128xf32> -> vector<1x128xf32>
    %10 = arith.addf %9, %1 : vector<1x128xf32>
    %11 = vector.extract_strided_slice %10 {offsets = [0, 0], sizes = [1, 32], strides = [1, 1]} : vector<1x128xf32> to vector<1x32xf32>
    %12 = arith.negf %11 : vector<1x32xf32>
    %13 = math.exp %12 : vector<1x32xf32>
    %cst_12 = arith.constant 1.000000e+00 : f32
    %14 = vector.broadcast %cst_12 : f32 to vector<1x32xf32>
    %15 = arith.addf %14, %13 : vector<1x32xf32>
    %16 = arith.divf %14, %15 : vector<1x32xf32>
    %17 = vector.extract_strided_slice %10 {offsets = [0, 32], sizes = [1, 32], strides = [1, 1]} : vector<1x128xf32> to vector<1x32xf32>
    %18 = arith.negf %17 : vector<1x32xf32>
    %19 = math.exp %18 : vector<1x32xf32>
    %cst_13 = arith.constant 1.000000e+00 : f32
    %20 = vector.broadcast %cst_13 : f32 to vector<1x32xf32>
    %21 = arith.addf %20, %19 : vector<1x32xf32>
    %22 = arith.divf %20, %21 : vector<1x32xf32>
    %23 = vector.extract_strided_slice %10 {offsets = [0, 64], sizes = [1, 32], strides = [1, 1]} : vector<1x128xf32> to vector<1x32xf32>
    %24 = vector.extract_strided_slice %10 {offsets = [0, 96], sizes = [1, 32], strides = [1, 1]} : vector<1x128xf32> to vector<1x32xf32>
    %25 = arith.mulf %16, %24 : vector<1x32xf32>
    %26 = arith.addf %23, %25 : vector<1x32xf32>
    %27 = math.tanh %26 : vector<1x32xf32>
    %cst_14 = arith.constant 1.000000e+00 : f32
    %28 = vector.broadcast %cst_14 : f32 to vector<1x32xf32>
    %29 = arith.subf %28, %22 : vector<1x32xf32>
    %30 = arith.mulf %29, %27 : vector<1x32xf32>
    %31 = arith.mulf %22, %4 : vector<1x32xf32>
    %32 = arith.addf %30, %31 : vector<1x32xf32>
    %cst_15 = arith.constant dense<0.000000e+00> : vector<1x128xf32>
    %33 = tpu.matmul %32, %2, %cst_15 {dimension_numbers = #tpu.dot_dimension_numbers<[1], [0], [0], [1], [0, 0, 1, 1], [], []>} : vector<1x32xf32>, vector<32x128xf32>, vector<1x128xf32> -> vector<1x128xf32>
    %34 = arith.addf %33, %3 : vector<1x128xf32>
    %cst_16 = arith.constant dense<0xFF800000> : vector<1xf32>
    %35 = vector.multi_reduction <maximumf>, %34, %cst_16 [1] : vector<1x128xf32> to vector<1xf32>
    %36 = vector.shape_cast %35 : vector<1xf32> to vector<1x1xf32>
    %37 = vector.broadcast %36 : vector<1x1xf32> to vector<1x128xf32>
    %38 = arith.subf %34, %37 : vector<1x128xf32>
    %39 = math.exp %38 : vector<1x128xf32>
    %cst_17 = arith.constant dense<0.000000e+00> : vector<1xf32>
    %40 = vector.multi_reduction <add>, %39, %cst_17 [1] : vector<1x128xf32> to vector<1xf32>
    %41 = vector.shape_cast %40 : vector<1xf32> to vector<1x1xf32>
    %42 = math.log %41 : vector<1x1xf32>
    %43 = arith.addf %42, %36 : vector<1x1xf32>
    %44 = vector.broadcast %43 : vector<1x1xf32> to vector<1x128xf32>
    %45 = arith.subf %34, %44 : vector<1x128xf32>
    %c1 = arith.constant 1 : index
    %c0_18 = arith.constant 0 : index
    %46 = vector.load %arg0[%c1, %c0_18] : memref<8x32xf32, #tpu.memory_space<vmem>>, vector<1x32xf32>
    %cst_19 = arith.constant 0.000000e+00 : f32
    %47 = vector.broadcast %cst_19 : f32 to vector<1x32xf32>
    %48 = arith.maximumf %46, %47 : vector<1x32xf32>
    %49 = tpu.concatenate %48, %32 in 1 : vector<1x32xf32>, vector<1x32xf32> -> vector<1x64xf32>
    %cst_20 = arith.constant dense<0.000000e+00> : vector<1x128xf32>
    %50 = tpu.matmul %49, %0, %cst_20 {dimension_numbers = #tpu.dot_dimension_numbers<[1], [0], [0], [1], [0, 0, 1, 1], [], []>} : vector<1x64xf32>, vector<64x128xf32>, vector<1x128xf32> -> vector<1x128xf32>
    %51 = arith.addf %50, %1 : vector<1x128xf32>
    %52 = vector.extract_strided_slice %51 {offsets = [0, 0], sizes = [1, 32], strides = [1, 1]} : vector<1x128xf32> to vector<1x32xf32>
    %53 = arith.negf %52 : vector<1x32xf32>
    %54 = math.exp %53 : vector<1x32xf32>
    %cst_21 = arith.constant 1.000000e+00 : f32
    %55 = vector.broadcast %cst_21 : f32 to vector<1x32xf32>
    %56 = arith.addf %55, %54 : vector<1x32xf32>
    %57 = arith.divf %55, %56 : vector<1x32xf32>
    %58 = vector.extract_strided_slice %51 {offsets = [0, 32], sizes = [1, 32], strides = [1, 1]} : vector<1x128xf32> to vector<1x32xf32>
    %59 = arith.negf %58 : vector<1x32xf32>
    %60 = math.exp %59 : vector<1x32xf32>
    %cst_22 = arith.constant 1.000000e+00 : f32
    %61 = vector.broadcast %cst_22 : f32 to vector<1x32xf32>
    %62 = arith.addf %61, %60 : vector<1x32xf32>
    %63 = arith.divf %61, %62 : vector<1x32xf32>
    %64 = vector.extract_strided_slice %51 {offsets = [0, 64], sizes = [1, 32], strides = [1, 1]} : vector<1x128xf32> to vector<1x32xf32>
    %65 = vector.extract_strided_slice %51 {offsets = [0, 96], sizes = [1, 32], strides = [1, 1]} : vector<1x128xf32> to vector<1x32xf32>
    %66 = arith.mulf %57, %65 : vector<1x32xf32>
    %67 = arith.addf %64, %66 : vector<1x32xf32>
    %68 = math.tanh %67 : vector<1x32xf32>
    %cst_23 = arith.constant 1.000000e+00 : f32
    %69 = vector.broadcast %cst_23 : f32 to vector<1x32xf32>
    %70 = arith.subf %69, %63 : vector<1x32xf32>
    %71 = arith.mulf %70, %68 : vector<1x32xf32>
    %72 = arith.mulf %63, %32 : vector<1x32xf32>
    %73 = arith.addf %71, %72 : vector<1x32xf32>
    %cst_24 = arith.constant dense<0.000000e+00> : vector<1x128xf32>
    %74 = tpu.matmul %73, %2, %cst_24 {dimension_numbers = #tpu.dot_dimension_numbers<[1], [0], [0], [1], [0, 0, 1, 1], [], []>} : vector<1x32xf32>, vector<32x128xf32>, vector<1x128xf32> -> vector<1x128xf32>
    %75 = arith.addf %74, %3 : vector<1x128xf32>
    %cst_25 = arith.constant dense<0xFF800000> : vector<1xf32>
    %76 = vector.multi_reduction <maximumf>, %75, %cst_25 [1] : vector<1x128xf32> to vector<1xf32>
    %77 = vector.shape_cast %76 : vector<1xf32> to vector<1x1xf32>
    %78 = vector.broadcast %77 : vector<1x1xf32> to vector<1x128xf32>
    %79 = arith.subf %75, %78 : vector<1x128xf32>
    %80 = math.exp %79 : vector<1x128xf32>
    %cst_26 = arith.constant dense<0.000000e+00> : vector<1xf32>
    %81 = vector.multi_reduction <add>, %80, %cst_26 [1] : vector<1x128xf32> to vector<1xf32>
    %82 = vector.shape_cast %81 : vector<1xf32> to vector<1x1xf32>
    %83 = math.log %82 : vector<1x1xf32>
    %84 = arith.addf %83, %77 : vector<1x1xf32>
    %85 = vector.broadcast %84 : vector<1x1xf32> to vector<1x128xf32>
    %86 = arith.subf %75, %85 : vector<1x128xf32>
    %c2 = arith.constant 2 : index
    %c0_27 = arith.constant 0 : index
    %87 = vector.load %arg0[%c2, %c0_27] : memref<8x32xf32, #tpu.memory_space<vmem>>, vector<1x32xf32>
    %cst_28 = arith.constant 0.000000e+00 : f32
    %88 = vector.broadcast %cst_28 : f32 to vector<1x32xf32>
    %89 = arith.maximumf %87, %88 : vector<1x32xf32>
    %90 = tpu.concatenate %89, %73 in 1 : vector<1x32xf32>, vector<1x32xf32> -> vector<1x64xf32>
    %cst_29 = arith.constant dense<0.000000e+00> : vector<1x128xf32>
    %91 = tpu.matmul %90, %0, %cst_29 {dimension_numbers = #tpu.dot_dimension_numbers<[1], [0], [0], [1], [0, 0, 1, 1], [], []>} : vector<1x64xf32>, vector<64x128xf32>, vector<1x128xf32> -> vector<1x128xf32>
    %92 = arith.addf %91, %1 : vector<1x128xf32>
    %93 = vector.extract_strided_slice %92 {offsets = [0, 0], sizes = [1, 32], strides = [1, 1]} : vector<1x128xf32> to vector<1x32xf32>
    %94 = arith.negf %93 : vector<1x32xf32>
    %95 = math.exp %94 : vector<1x32xf32>
    %cst_30 = arith.constant 1.000000e+00 : f32
    %96 = vector.broadcast %cst_30 : f32 to vector<1x32xf32>
    %97 = arith.addf %96, %95 : vector<1x32xf32>
    %98 = arith.divf %96, %97 : vector<1x32xf32>
    %99 = vector.extract_strided_slice %92 {offsets = [0, 32], sizes = [1, 32], strides = [1, 1]} : vector<1x128xf32> to vector<1x32xf32>
    %100 = arith.negf %99 : vector<1x32xf32>
    %101 = math.exp %100 : vector<1x32xf32>
    %cst_31 = arith.constant 1.000000e+00 : f32
    %102 = vector.broadcast %cst_31 : f32 to vector<1x32xf32>
    %103 = arith.addf %102, %101 : vector<1x32xf32>
    %104 = arith.divf %102, %103 : vector<1x32xf32>
    %105 = vector.extract_strided_slice %92 {offsets = [0, 64], sizes = [1, 32], strides = [1, 1]} : vector<1x128xf32> to vector<1x32xf32>
    %106 = vector.extract_strided_slice %92 {offsets = [0, 96], sizes = [1, 32], strides = [1, 1]} : vector<1x128xf32> to vector<1x32xf32>
    %107 = arith.mulf %98, %106 : vector<1x32xf32>
    %108 = arith.addf %105, %107 : vector<1x32xf32>
    %109 = math.tanh %108 : vector<1x32xf32>
    %cst_32 = arith.constant 1.000000e+00 : f32
    %110 = vector.broadcast %cst_32 : f32 to vector<1x32xf32>
    %111 = arith.subf %110, %104 : vector<1x32xf32>
    %112 = arith.mulf %111, %109 : vector<1x32xf32>
    %113 = arith.mulf %104, %73 : vector<1x32xf32>
    %114 = arith.addf %112, %113 : vector<1x32xf32>
    %cst_33 = arith.constant dense<0.000000e+00> : vector<1x128xf32>
    %115 = tpu.matmul %114, %2, %cst_33 {dimension_numbers = #tpu.dot_dimension_numbers<[1], [0], [0], [1], [0, 0, 1, 1], [], []>} : vector<1x32xf32>, vector<32x128xf32>, vector<1x128xf32> -> vector<1x128xf32>
    %116 = arith.addf %115, %3 : vector<1x128xf32>
    %cst_34 = arith.constant dense<0xFF800000> : vector<1xf32>
    %117 = vector.multi_reduction <maximumf>, %116, %cst_34 [1] : vector<1x128xf32> to vector<1xf32>
    %118 = vector.shape_cast %117 : vector<1xf32> to vector<1x1xf32>
    %119 = vector.broadcast %118 : vector<1x1xf32> to vector<1x128xf32>
    %120 = arith.subf %116, %119 : vector<1x128xf32>
    %121 = math.exp %120 : vector<1x128xf32>
    %cst_35 = arith.constant dense<0.000000e+00> : vector<1xf32>
    %122 = vector.multi_reduction <add>, %121, %cst_35 [1] : vector<1x128xf32> to vector<1xf32>
    %123 = vector.shape_cast %122 : vector<1xf32> to vector<1x1xf32>
    %124 = math.log %123 : vector<1x1xf32>
    %125 = arith.addf %124, %118 : vector<1x1xf32>
    %126 = vector.broadcast %125 : vector<1x1xf32> to vector<1x128xf32>
    %127 = arith.subf %116, %126 : vector<1x128xf32>
    %c3 = arith.constant 3 : index
    %c0_36 = arith.constant 0 : index
    %128 = vector.load %arg0[%c3, %c0_36] : memref<8x32xf32, #tpu.memory_space<vmem>>, vector<1x32xf32>
    %cst_37 = arith.constant 0.000000e+00 : f32
    %129 = vector.broadcast %cst_37 : f32 to vector<1x32xf32>
    %130 = arith.maximumf %128, %129 : vector<1x32xf32>
    %131 = tpu.concatenate %130, %114 in 1 : vector<1x32xf32>, vector<1x32xf32> -> vector<1x64xf32>
    %cst_38 = arith.constant dense<0.000000e+00> : vector<1x128xf32>
    %132 = tpu.matmul %131, %0, %cst_38 {dimension_numbers = #tpu.dot_dimension_numbers<[1], [0], [0], [1], [0, 0, 1, 1], [], []>} : vector<1x64xf32>, vector<64x128xf32>, vector<1x128xf32> -> vector<1x128xf32>
    %133 = arith.addf %132, %1 : vector<1x128xf32>
    %134 = vector.extract_strided_slice %133 {offsets = [0, 0], sizes = [1, 32], strides = [1, 1]} : vector<1x128xf32> to vector<1x32xf32>
    %135 = arith.negf %134 : vector<1x32xf32>
    %136 = math.exp %135 : vector<1x32xf32>
    %cst_39 = arith.constant 1.000000e+00 : f32
    %137 = vector.broadcast %cst_39 : f32 to vector<1x32xf32>
    %138 = arith.addf %137, %136 : vector<1x32xf32>
    %139 = arith.divf %137, %138 : vector<1x32xf32>
    %140 = vector.extract_strided_slice %133 {offsets = [0, 32], sizes = [1, 32], strides = [1, 1]} : vector<1x128xf32> to vector<1x32xf32>
    %141 = arith.negf %140 : vector<1x32xf32>
    %142 = math.exp %141 : vector<1x32xf32>
    %cst_40 = arith.constant 1.000000e+00 : f32
    %143 = vector.broadcast %cst_40 : f32 to vector<1x32xf32>
    %144 = arith.addf %143, %142 : vector<1x32xf32>
    %145 = arith.divf %143, %144 : vector<1x32xf32>
    %146 = vector.extract_strided_slice %133 {offsets = [0, 64], sizes = [1, 32], strides = [1, 1]} : vector<1x128xf32> to vector<1x32xf32>
    %147 = vector.extract_strided_slice %133 {offsets = [0, 96], sizes = [1, 32], strides = [1, 1]} : vector<1x128xf32> to vector<1x32xf32>
    %148 = arith.mulf %139, %147 : vector<1x32xf32>
    %149 = arith.addf %146, %148 : vector<1x32xf32>
    %150 = math.tanh %149 : vector<1x32xf32>
    %cst_41 = arith.constant 1.000000e+00 : f32
    %151 = vector.broadcast %cst_41 : f32 to vector<1x32xf32>
    %152 = arith.subf %151, %145 : vector<1x32xf32>
    %153 = arith.mulf %152, %150 : vector<1x32xf32>
    %154 = arith.mulf %145, %114 : vector<1x32xf32>
    %155 = arith.addf %153, %154 : vector<1x32xf32>
    %cst_42 = arith.constant dense<0.000000e+00> : vector<1x128xf32>
    %156 = tpu.matmul %155, %2, %cst_42 {dimension_numbers = #tpu.dot_dimension_numbers<[1], [0], [0], [1], [0, 0, 1, 1], [], []>} : vector<1x32xf32>, vector<32x128xf32>, vector<1x128xf32> -> vector<1x128xf32>
    %157 = arith.addf %156, %3 : vector<1x128xf32>
    %cst_43 = arith.constant dense<0xFF800000> : vector<1xf32>
    %158 = vector.multi_reduction <maximumf>, %157, %cst_43 [1] : vector<1x128xf32> to vector<1xf32>
    %159 = vector.shape_cast %158 : vector<1xf32> to vector<1x1xf32>
    %160 = vector.broadcast %159 : vector<1x1xf32> to vector<1x128xf32>
    %161 = arith.subf %157, %160 : vector<1x128xf32>
    %162 = math.exp %161 : vector<1x128xf32>
    %cst_44 = arith.constant dense<0.000000e+00> : vector<1xf32>
    %163 = vector.multi_reduction <add>, %162, %cst_44 [1] : vector<1x128xf32> to vector<1xf32>
    %164 = vector.shape_cast %163 : vector<1xf32> to vector<1x1xf32>
    %165 = math.log %164 : vector<1x1xf32>
    %166 = arith.addf %165, %159 : vector<1x1xf32>
    %167 = vector.broadcast %166 : vector<1x1xf32> to vector<1x128xf32>
    %168 = arith.subf %157, %167 : vector<1x128xf32>
    %c4 = arith.constant 4 : index
    %c0_45 = arith.constant 0 : index
    %169 = vector.load %arg0[%c4, %c0_45] : memref<8x32xf32, #tpu.memory_space<vmem>>, vector<1x32xf32>
    %cst_46 = arith.constant 0.000000e+00 : f32
    %170 = vector.broadcast %cst_46 : f32 to vector<1x32xf32>
    %171 = arith.maximumf %169, %170 : vector<1x32xf32>
    %172 = tpu.concatenate %171, %155 in 1 : vector<1x32xf32>, vector<1x32xf32> -> vector<1x64xf32>
    %cst_47 = arith.constant dense<0.000000e+00> : vector<1x128xf32>
    %173 = tpu.matmul %172, %0, %cst_47 {dimension_numbers = #tpu.dot_dimension_numbers<[1], [0], [0], [1], [0, 0, 1, 1], [], []>} : vector<1x64xf32>, vector<64x128xf32>, vector<1x128xf32> -> vector<1x128xf32>
    %174 = arith.addf %173, %1 : vector<1x128xf32>
    %175 = vector.extract_strided_slice %174 {offsets = [0, 0], sizes = [1, 32], strides = [1, 1]} : vector<1x128xf32> to vector<1x32xf32>
    %176 = arith.negf %175 : vector<1x32xf32>
    %177 = math.exp %176 : vector<1x32xf32>
    %cst_48 = arith.constant 1.000000e+00 : f32
    %178 = vector.broadcast %cst_48 : f32 to vector<1x32xf32>
    %179 = arith.addf %178, %177 : vector<1x32xf32>
    %180 = arith.divf %178, %179 : vector<1x32xf32>
    %181 = vector.extract_strided_slice %174 {offsets = [0, 32], sizes = [1, 32], strides = [1, 1]} : vector<1x128xf32> to vector<1x32xf32>
    %182 = arith.negf %181 : vector<1x32xf32>
    %183 = math.exp %182 : vector<1x32xf32>
    %cst_49 = arith.constant 1.000000e+00 : f32
    %184 = vector.broadcast %cst_49 : f32 to vector<1x32xf32>
    %185 = arith.addf %184, %183 : vector<1x32xf32>
    %186 = arith.divf %184, %185 : vector<1x32xf32>
    %187 = vector.extract_strided_slice %174 {offsets = [0, 64], sizes = [1, 32], strides = [1, 1]} : vector<1x128xf32> to vector<1x32xf32>
    %188 = vector.extract_strided_slice %174 {offsets = [0, 96], sizes = [1, 32], strides = [1, 1]} : vector<1x128xf32> to vector<1x32xf32>
    %189 = arith.mulf %180, %188 : vector<1x32xf32>
    %190 = arith.addf %187, %189 : vector<1x32xf32>
    %191 = math.tanh %190 : vector<1x32xf32>
    %cst_50 = arith.constant 1.000000e+00 : f32
    %192 = vector.broadcast %cst_50 : f32 to vector<1x32xf32>
    %193 = arith.subf %192, %186 : vector<1x32xf32>
    %194 = arith.mulf %193, %191 : vector<1x32xf32>
    %195 = arith.mulf %186, %155 : vector<1x32xf32>
    %196 = arith.addf %194, %195 : vector<1x32xf32>
    %cst_51 = arith.constant dense<0.000000e+00> : vector<1x128xf32>
    %197 = tpu.matmul %196, %2, %cst_51 {dimension_numbers = #tpu.dot_dimension_numbers<[1], [0], [0], [1], [0, 0, 1, 1], [], []>} : vector<1x32xf32>, vector<32x128xf32>, vector<1x128xf32> -> vector<1x128xf32>
    %198 = arith.addf %197, %3 : vector<1x128xf32>
    %cst_52 = arith.constant dense<0xFF800000> : vector<1xf32>
    %199 = vector.multi_reduction <maximumf>, %198, %cst_52 [1] : vector<1x128xf32> to vector<1xf32>
    %200 = vector.shape_cast %199 : vector<1xf32> to vector<1x1xf32>
    %201 = vector.broadcast %200 : vector<1x1xf32> to vector<1x128xf32>
    %202 = arith.subf %198, %201 : vector<1x128xf32>
    %203 = math.exp %202 : vector<1x128xf32>
    %cst_53 = arith.constant dense<0.000000e+00> : vector<1xf32>
    %204 = vector.multi_reduction <add>, %203, %cst_53 [1] : vector<1x128xf32> to vector<1xf32>
    %205 = vector.shape_cast %204 : vector<1xf32> to vector<1x1xf32>
    %206 = math.log %205 : vector<1x1xf32>
    %207 = arith.addf %206, %200 : vector<1x1xf32>
    %208 = vector.broadcast %207 : vector<1x1xf32> to vector<1x128xf32>
    %209 = arith.subf %198, %208 : vector<1x128xf32>
    %c5 = arith.constant 5 : index
    %c0_54 = arith.constant 0 : index
    %210 = vector.load %arg0[%c5, %c0_54] : memref<8x32xf32, #tpu.memory_space<vmem>>, vector<1x32xf32>
    %cst_55 = arith.constant 0.000000e+00 : f32
    %211 = vector.broadcast %cst_55 : f32 to vector<1x32xf32>
    %212 = arith.maximumf %210, %211 : vector<1x32xf32>
    %213 = tpu.concatenate %212, %196 in 1 : vector<1x32xf32>, vector<1x32xf32> -> vector<1x64xf32>
    %cst_56 = arith.constant dense<0.000000e+00> : vector<1x128xf32>
    %214 = tpu.matmul %213, %0, %cst_56 {dimension_numbers = #tpu.dot_dimension_numbers<[1], [0], [0], [1], [0, 0, 1, 1], [], []>} : vector<1x64xf32>, vector<64x128xf32>, vector<1x128xf32> -> vector<1x128xf32>
    %215 = arith.addf %214, %1 : vector<1x128xf32>
    %216 = vector.extract_strided_slice %215 {offsets = [0, 0], sizes = [1, 32], strides = [1, 1]} : vector<1x128xf32> to vector<1x32xf32>
    %217 = arith.negf %216 : vector<1x32xf32>
    %218 = math.exp %217 : vector<1x32xf32>
    %cst_57 = arith.constant 1.000000e+00 : f32
    %219 = vector.broadcast %cst_57 : f32 to vector<1x32xf32>
    %220 = arith.addf %219, %218 : vector<1x32xf32>
    %221 = arith.divf %219, %220 : vector<1x32xf32>
    %222 = vector.extract_strided_slice %215 {offsets = [0, 32], sizes = [1, 32], strides = [1, 1]} : vector<1x128xf32> to vector<1x32xf32>
    %223 = arith.negf %222 : vector<1x32xf32>
    %224 = math.exp %223 : vector<1x32xf32>
    %cst_58 = arith.constant 1.000000e+00 : f32
    %225 = vector.broadcast %cst_58 : f32 to vector<1x32xf32>
    %226 = arith.addf %225, %224 : vector<1x32xf32>
    %227 = arith.divf %225, %226 : vector<1x32xf32>
    %228 = vector.extract_strided_slice %215 {offsets = [0, 64], sizes = [1, 32], strides = [1, 1]} : vector<1x128xf32> to vector<1x32xf32>
    %229 = vector.extract_strided_slice %215 {offsets = [0, 96], sizes = [1, 32], strides = [1, 1]} : vector<1x128xf32> to vector<1x32xf32>
    %230 = arith.mulf %221, %229 : vector<1x32xf32>
    %231 = arith.addf %228, %230 : vector<1x32xf32>
    %232 = math.tanh %231 : vector<1x32xf32>
    %cst_59 = arith.constant 1.000000e+00 : f32
    %233 = vector.broadcast %cst_59 : f32 to vector<1x32xf32>
    %234 = arith.subf %233, %227 : vector<1x32xf32>
    %235 = arith.mulf %234, %232 : vector<1x32xf32>
    %236 = arith.mulf %227, %196 : vector<1x32xf32>
    %237 = arith.addf %235, %236 : vector<1x32xf32>
    %cst_60 = arith.constant dense<0.000000e+00> : vector<1x128xf32>
    %238 = tpu.matmul %237, %2, %cst_60 {dimension_numbers = #tpu.dot_dimension_numbers<[1], [0], [0], [1], [0, 0, 1, 1], [], []>} : vector<1x32xf32>, vector<32x128xf32>, vector<1x128xf32> -> vector<1x128xf32>
    %239 = arith.addf %238, %3 : vector<1x128xf32>
    %cst_61 = arith.constant dense<0xFF800000> : vector<1xf32>
    %240 = vector.multi_reduction <maximumf>, %239, %cst_61 [1] : vector<1x128xf32> to vector<1xf32>
    %241 = vector.shape_cast %240 : vector<1xf32> to vector<1x1xf32>
    %242 = vector.broadcast %241 : vector<1x1xf32> to vector<1x128xf32>
    %243 = arith.subf %239, %242 : vector<1x128xf32>
    %244 = math.exp %243 : vector<1x128xf32>
    %cst_62 = arith.constant dense<0.000000e+00> : vector<1xf32>
    %245 = vector.multi_reduction <add>, %244, %cst_62 [1] : vector<1x128xf32> to vector<1xf32>
    %246 = vector.shape_cast %245 : vector<1xf32> to vector<1x1xf32>
    %247 = math.log %246 : vector<1x1xf32>
    %248 = arith.addf %247, %241 : vector<1x1xf32>
    %249 = vector.broadcast %248 : vector<1x1xf32> to vector<1x128xf32>
    %250 = arith.subf %239, %249 : vector<1x128xf32>
    %c6 = arith.constant 6 : index
    %c0_63 = arith.constant 0 : index
    %251 = vector.load %arg0[%c6, %c0_63] : memref<8x32xf32, #tpu.memory_space<vmem>>, vector<1x32xf32>
    %cst_64 = arith.constant 0.000000e+00 : f32
    %252 = vector.broadcast %cst_64 : f32 to vector<1x32xf32>
    %253 = arith.maximumf %251, %252 : vector<1x32xf32>
    %254 = tpu.concatenate %253, %237 in 1 : vector<1x32xf32>, vector<1x32xf32> -> vector<1x64xf32>
    %cst_65 = arith.constant dense<0.000000e+00> : vector<1x128xf32>
    %255 = tpu.matmul %254, %0, %cst_65 {dimension_numbers = #tpu.dot_dimension_numbers<[1], [0], [0], [1], [0, 0, 1, 1], [], []>} : vector<1x64xf32>, vector<64x128xf32>, vector<1x128xf32> -> vector<1x128xf32>
    %256 = arith.addf %255, %1 : vector<1x128xf32>
    %257 = vector.extract_strided_slice %256 {offsets = [0, 0], sizes = [1, 32], strides = [1, 1]} : vector<1x128xf32> to vector<1x32xf32>
    %258 = arith.negf %257 : vector<1x32xf32>
    %259 = math.exp %258 : vector<1x32xf32>
    %cst_66 = arith.constant 1.000000e+00 : f32
    %260 = vector.broadcast %cst_66 : f32 to vector<1x32xf32>
    %261 = arith.addf %260, %259 : vector<1x32xf32>
    %262 = arith.divf %260, %261 : vector<1x32xf32>
    %263 = vector.extract_strided_slice %256 {offsets = [0, 32], sizes = [1, 32], strides = [1, 1]} : vector<1x128xf32> to vector<1x32xf32>
    %264 = arith.negf %263 : vector<1x32xf32>
    %265 = math.exp %264 : vector<1x32xf32>
    %cst_67 = arith.constant 1.000000e+00 : f32
    %266 = vector.broadcast %cst_67 : f32 to vector<1x32xf32>
    %267 = arith.addf %266, %265 : vector<1x32xf32>
    %268 = arith.divf %266, %267 : vector<1x32xf32>
    %269 = vector.extract_strided_slice %256 {offsets = [0, 64], sizes = [1, 32], strides = [1, 1]} : vector<1x128xf32> to vector<1x32xf32>
    %270 = vector.extract_strided_slice %256 {offsets = [0, 96], sizes = [1, 32], strides = [1, 1]} : vector<1x128xf32> to vector<1x32xf32>
    %271 = arith.mulf %262, %270 : vector<1x32xf32>
    %272 = arith.addf %269, %271 : vector<1x32xf32>
    %273 = math.tanh %272 : vector<1x32xf32>
    %cst_68 = arith.constant 1.000000e+00 : f32
    %274 = vector.broadcast %cst_68 : f32 to vector<1x32xf32>
    %275 = arith.subf %274, %268 : vector<1x32xf32>
    %276 = arith.mulf %275, %273 : vector<1x32xf32>
    %277 = arith.mulf %268, %237 : vector<1x32xf32>
    %278 = arith.addf %276, %277 : vector<1x32xf32>
    %cst_69 = arith.constant dense<0.000000e+00> : vector<1x128xf32>
    %279 = tpu.matmul %278, %2, %cst_69 {dimension_numbers = #tpu.dot_dimension_numbers<[1], [0], [0], [1], [0, 0, 1, 1], [], []>} : vector<1x32xf32>, vector<32x128xf32>, vector<1x128xf32> -> vector<1x128xf32>
    %280 = arith.addf %279, %3 : vector<1x128xf32>
    %cst_70 = arith.constant dense<0xFF800000> : vector<1xf32>
    %281 = vector.multi_reduction <maximumf>, %280, %cst_70 [1] : vector<1x128xf32> to vector<1xf32>
    %282 = vector.shape_cast %281 : vector<1xf32> to vector<1x1xf32>
    %283 = vector.broadcast %282 : vector<1x1xf32> to vector<1x128xf32>
    %284 = arith.subf %280, %283 : vector<1x128xf32>
    %285 = math.exp %284 : vector<1x128xf32>
    %cst_71 = arith.constant dense<0.000000e+00> : vector<1xf32>
    %286 = vector.multi_reduction <add>, %285, %cst_71 [1] : vector<1x128xf32> to vector<1xf32>
    %287 = vector.shape_cast %286 : vector<1xf32> to vector<1x1xf32>
    %288 = math.log %287 : vector<1x1xf32>
    %289 = arith.addf %288, %282 : vector<1x1xf32>
    %290 = vector.broadcast %289 : vector<1x1xf32> to vector<1x128xf32>
    %291 = arith.subf %280, %290 : vector<1x128xf32>
    %c7 = arith.constant 7 : index
    %c0_72 = arith.constant 0 : index
    %292 = vector.load %arg0[%c7, %c0_72] : memref<8x32xf32, #tpu.memory_space<vmem>>, vector<1x32xf32>
    %cst_73 = arith.constant 0.000000e+00 : f32
    %293 = vector.broadcast %cst_73 : f32 to vector<1x32xf32>
    %294 = arith.maximumf %292, %293 : vector<1x32xf32>
    %295 = tpu.concatenate %294, %278 in 1 : vector<1x32xf32>, vector<1x32xf32> -> vector<1x64xf32>
    %cst_74 = arith.constant dense<0.000000e+00> : vector<1x128xf32>
    %296 = tpu.matmul %295, %0, %cst_74 {dimension_numbers = #tpu.dot_dimension_numbers<[1], [0], [0], [1], [0, 0, 1, 1], [], []>} : vector<1x64xf32>, vector<64x128xf32>, vector<1x128xf32> -> vector<1x128xf32>
    %297 = arith.addf %296, %1 : vector<1x128xf32>
    %298 = vector.extract_strided_slice %297 {offsets = [0, 0], sizes = [1, 32], strides = [1, 1]} : vector<1x128xf32> to vector<1x32xf32>
    %299 = arith.negf %298 : vector<1x32xf32>
    %300 = math.exp %299 : vector<1x32xf32>
    %cst_75 = arith.constant 1.000000e+00 : f32
    %301 = vector.broadcast %cst_75 : f32 to vector<1x32xf32>
    %302 = arith.addf %301, %300 : vector<1x32xf32>
    %303 = arith.divf %301, %302 : vector<1x32xf32>
    %304 = vector.extract_strided_slice %297 {offsets = [0, 32], sizes = [1, 32], strides = [1, 1]} : vector<1x128xf32> to vector<1x32xf32>
    %305 = arith.negf %304 : vector<1x32xf32>
    %306 = math.exp %305 : vector<1x32xf32>
    %cst_76 = arith.constant 1.000000e+00 : f32
    %307 = vector.broadcast %cst_76 : f32 to vector<1x32xf32>
    %308 = arith.addf %307, %306 : vector<1x32xf32>
    %309 = arith.divf %307, %308 : vector<1x32xf32>
    %310 = vector.extract_strided_slice %297 {offsets = [0, 64], sizes = [1, 32], strides = [1, 1]} : vector<1x128xf32> to vector<1x32xf32>
    %311 = vector.extract_strided_slice %297 {offsets = [0, 96], sizes = [1, 32], strides = [1, 1]} : vector<1x128xf32> to vector<1x32xf32>
    %312 = arith.mulf %303, %311 : vector<1x32xf32>
    %313 = arith.addf %310, %312 : vector<1x32xf32>
    %314 = math.tanh %313 : vector<1x32xf32>
    %cst_77 = arith.constant 1.000000e+00 : f32
    %315 = vector.broadcast %cst_77 : f32 to vector<1x32xf32>
    %316 = arith.subf %315, %309 : vector<1x32xf32>
    %317 = arith.mulf %316, %314 : vector<1x32xf32>
    %318 = arith.mulf %309, %278 : vector<1x32xf32>
    %319 = arith.addf %317, %318 : vector<1x32xf32>
    %cst_78 = arith.constant dense<0.000000e+00> : vector<1x128xf32>
    %320 = tpu.matmul %319, %2, %cst_78 {dimension_numbers = #tpu.dot_dimension_numbers<[1], [0], [0], [1], [0, 0, 1, 1], [], []>} : vector<1x32xf32>, vector<32x128xf32>, vector<1x128xf32> -> vector<1x128xf32>
    %321 = arith.addf %320, %3 : vector<1x128xf32>
    %cst_79 = arith.constant dense<0xFF800000> : vector<1xf32>
    %322 = vector.multi_reduction <maximumf>, %321, %cst_79 [1] : vector<1x128xf32> to vector<1xf32>
    %323 = vector.shape_cast %322 : vector<1xf32> to vector<1x1xf32>
    %324 = vector.broadcast %323 : vector<1x1xf32> to vector<1x128xf32>
    %325 = arith.subf %321, %324 : vector<1x128xf32>
    %326 = math.exp %325 : vector<1x128xf32>
    %cst_80 = arith.constant dense<0.000000e+00> : vector<1xf32>
    %327 = vector.multi_reduction <add>, %326, %cst_80 [1] : vector<1x128xf32> to vector<1xf32>
    %328 = vector.shape_cast %327 : vector<1xf32> to vector<1x1xf32>
    %329 = math.log %328 : vector<1x1xf32>
    %330 = arith.addf %329, %323 : vector<1x1xf32>
    %331 = vector.broadcast %330 : vector<1x1xf32> to vector<1x128xf32>
    %332 = arith.subf %321, %331 : vector<1x128xf32>
    %333 = tpu.concatenate %45, %86, %127, %168, %209, %250, %291, %332 in 0 : vector<1x128xf32>, vector<1x128xf32>, vector<1x128xf32>, vector<1x128xf32>, vector<1x128xf32>, vector<1x128xf32>, vector<1x128xf32>, vector<1x128xf32> -> vector<8x128xf32>
    %c0_81 = arith.constant 0 : index
    %c0_82 = arith.constant 0 : index
    %334 = vector.load %arg6[%c0_81, %c0_82] : memref<8x128xf32, #tpu.memory_space<vmem>>, vector<8x128xf32>
    tpu.vector_store %arg6[%c0_81, %c0_82], %333 {strides = array<i32>} : memref<8x128xf32, #tpu.memory_space<vmem>>, vector<8x128xf32>,
    %c0_83 = arith.constant 0 : index
    %c0_84 = arith.constant 0 : index
    %335 = vector.load %arg7[%c0_83, %c0_84] : memref<1x32xf32, #tpu.memory_space<vmem>>, vector<1x32xf32>
    tpu.vector_store %arg7[%c0_83, %c0_84], %319 {strides = array<i32>} : memref<1x32xf32, #tpu.memory_space<vmem>>, vector<1x32xf32>,
    return
  }
}

</mosaic_0001>

<llo_original>
// kernel: tpu_custom_call.1
$region0: #{tpu_custom_call.1}
  #allocation0 [shape = 'u32[]', space=smem, size = 0x4, offset = 0x4, fixed_abs, tag = 'smem constant byte address 0x4 - core index']
  #allocation1 [shape = 'u32[72,128]{1,0:T(1,128)}', space=vmem, size = 0x9000, scoped, tag = 'internal scratch']
  %s0 = inlined_call_operand.hbm [shape: f32[8,32], index: 0, kind: input, shape index: {}]
  %s1 = inlined_call_operand.hbm [shape: f32[1,32], index: 1, kind: input, shape index: {}]
  %s2 = inlined_call_operand.hbm [shape: f32[64,128], index: 2, kind: input, shape index: {}]
  %s3 = inlined_call_operand.vmem [shape: f32[1,128], index: 3, kind: input, shape index: {}]
  %s4 = inlined_call_operand.hbm [shape: f32[32,128], index: 4, kind: input, shape index: {}]
  %s5 = inlined_call_operand.vmem [shape: f32[1,128], index: 5, kind: input, shape index: {}]
  %s6 = inlined_call_operand.hbm [shape: f32[8,128], index: 6, kind: output, shape index: {0}]
  %s7 = inlined_call_operand.hbm [shape: f32[1,32], index: 7, kind: output, shape index: {1}]
  %8 = xla_tuple %s6, %s7
  %s9 = sld [smem:[#allocation0]]
  $region58: #{tpu_custom_call.1} parent=0
    _
  %s11 = ssub.s32 1, %s9
  %s12 = scalar_select 0, %s11, %s9
  $region1: #{tpu_custom_call.1} parent=0
    #allocation2 [shape = 'u8[4096]{0}', space=vmem, size = 0x1000, scoped, tag = 'input window, operand 0, single buffered']
    #allocation3 [shape = 's32[1]{0}', space=sflag, size = 0x4, scoped, tag = 'scoped memory for tpu_custom_call.1']
    #allocation4 [shape = 's32[1]{0}', space=sflag, size = 0x4, scoped, tag = 'scoped memory for tpu_custom_call.1']
    #allocation5 [shape = 'u8[512]{0}', space=vmem, size = 0x400, scoped, tag = 'input window, operand 1, single buffered']
    #allocation6 [shape = 's32[1]{0}', space=sflag, size = 0x4, scoped, tag = 'scoped memory for tpu_custom_call.1']
    #allocation7 [shape = 'u8[32768]{0}', space=vmem, size = 0x8000, scoped, tag = 'input window, operand 2, single buffered']
    #allocation8 [shape = 'u8[16384]{0}', space=vmem, size = 0x4000, scoped, tag = 'input window, operand 4, single buffered']
    #allocation9 [shape = 's32[1]{0}', space=sflag, size = 0x4, scoped, tag = 'scoped memory for tpu_custom_call.1']
    #allocation10 [shape = 'u8[4096]{0}', space=vmem, size = 0x1000, scoped, tag = 'output window, operand 0, single buffered']
    #allocation11 [shape = 'u8[512]{0}', space=vmem, size = 0x400, scoped, tag = 'output window, operand 1, single buffered']
    #allocation12 [shape = 's32[1]{0}', space=sflag, size = 0x4, scoped, tag = 'scoped memory for tpu_custom_call.1']
    %13 = vsyncpa [#allocation3], 0
    %14 = vsyncpa [#allocation6], 0
    %15 = vsyncpa [#allocation9], 0
    %16 = vsyncpa [#allocation4], 0
    %17 = vsyncpa [#allocation12], 0
    // Predicated region
    $region2: #{tpu_custom_call.1} parent=1 // pred_check
      _
    $region3: #{tpu_custom_call.1} parent=1 // pred_check_branch
      %19 = sbr.rel (0) target = $region5
    $region4: #{tpu_custom_call.1} parent=1 // pred_region
      %21 = vsyncadd [#allocation3], 0
      %s23 = sshll.u32 %s0, 4
      %s24 = int_to_ptr.hbm [resolvable:$true] %s23
      %s25 = sshll.u32 [#allocation2], 4
      %s26 = int_to_ptr.vmem [resolvable:$true] %s25
      %28 = dma.hbm_to_vmem [thread:$0]  %s24, 128, %s26, [#allocation3]
    $region5: #{tpu_custom_call.1} parent=1 // pred_fallthru
      _
    // Predicated region
    $region6: #{tpu_custom_call.1} parent=1 // pred_check
      _
    $region7: #{tpu_custom_call.1} parent=1 // pred_check_branch
      %30 = sbr.rel (0) target = $region9
    $region8: #{tpu_custom_call.1} parent=1 // pred_region
      %32 = vsyncadd [#allocation6], 0
      %s34 = sshll.u32 %s1, 4
      %s35 = int_to_ptr.hbm [resolvable:$true] %s34
      %s36 = sshll.u32 [#allocation5], 4
      %s37 = int_to_ptr.vmem [resolvable:$true] %s36
      %39 = dma.hbm_to_vmem [thread:$0]  %s35, 16, %s37, [#allocation6]
    $region9: #{tpu_custom_call.1} parent=1 // pred_fallthru
      _
    // Predicated region
    $region10: #{tpu_custom_call.1} parent=1 // pred_check
      _
    $region11: #{tpu_custom_call.1} parent=1 // pred_check_branch
      %41 = sbr.rel (0) target = $region13
    $region12: #{tpu_custom_call.1} parent=1 // pred_region
      %43 = vsyncadd [#allocation6], 0
      %s44 = sshll.u32 %s2, 4
      %s45 = int_to_ptr.hbm [resolvable:$true] %s44
      %s46 = sshll.u32 [#allocation7], 4
      %s47 = int_to_ptr.vmem [resolvable:$true] %s46
      %52 = dma.hbm_to_vmem [thread:$0]  %s45, 1024, %s47, [#allocation6], 128, 128, 8
    $region13: #{tpu_custom_call.1} parent=1 // pred_fallthru
      _
    // Predicated region
    $region14: #{tpu_custom_call.1} parent=1 // pred_check
      _
    $region15: #{tpu_custom_call.1} parent=1 // pred_check_branch
      %54 = sbr.rel (0) target = $region17
    $region16: #{tpu_custom_call.1} parent=1 // pred_region
      _
    $region17: #{tpu_custom_call.1} parent=1 // pred_fallthru
      _
    // Predicated region
    $region18: #{tpu_custom_call.1} parent=1 // pred_check
      _
    $region19: #{tpu_custom_call.1} parent=1 // pred_check_branch
      %56 = sbr.rel (0) target = $region21
    $region20: #{tpu_custom_call.1} parent=1 // pred_region
      %58 = vsyncadd [#allocation9], 0
      %s59 = sshll.u32 %s4, 4
      %s60 = int_to_ptr.hbm [resolvable:$true] %s59
      %s61 = sshll.u32 [#allocation8], 4
      %s62 = int_to_ptr.vmem [resolvable:$true] %s61
      %67 = dma.hbm_to_vmem [thread:$0]  %s60, 512, %s62, [#allocation9], 128, 128, 8
    $region21: #{tpu_custom_call.1} parent=1 // pred_fallthru
      _
    // Predicated region
    $region22: #{tpu_custom_call.1} parent=1 // pred_check
      _
    $region23: #{tpu_custom_call.1} parent=1 // pred_check_branch
      %69 = sbr.rel (0) target = $region25
    $region24: #{tpu_custom_call.1} parent=1 // pred_region
      _
    $region25: #{tpu_custom_call.1} parent=1 // pred_fallthru
      _
    // Predicated region
    $region26: #{tpu_custom_call.1} parent=1 // pred_check
      _
    $region27: #{tpu_custom_call.1} parent=1 // pred_check_branch
      %71 = sbr.rel (0) target = $region29
    $region28: #{tpu_custom_call.1} parent=1 // pred_region
      %73 = dma.done [#allocation3], 128
    $region29: #{tpu_custom_call.1} parent=1 // pred_fallthru
      _
    // Predicated region
    $region30: #{tpu_custom_call.1} parent=1 // pred_check
      _
    $region31: #{tpu_custom_call.1} parent=1 // pred_check_branch
      %75 = sbr.rel (0) target = $region33
    $region32: #{tpu_custom_call.1} parent=1 // pred_region
      %77 = dma.done [#allocation6], 16
    $region33: #{tpu_custom_call.1} parent=1 // pred_fallthru
      _
    // Predicated region
    $region34: #{tpu_custom_call.1} parent=1 // pred_check
      _
    $region35: #{tpu_custom_call.1} parent=1 // pred_check_branch
      %79 = sbr.rel (0) target = $region37
    $region36: #{tpu_custom_call.1} parent=1 // pred_region
      %81 = dma.done [#allocation6], 1024
    $region37: #{tpu_custom_call.1} parent=1 // pred_fallthru
      _
    // Predicated region
    $region38: #{tpu_custom_call.1} parent=1 // pred_check
      _
    $region39: #{tpu_custom_call.1} parent=1 // pred_check_branch
      %83 = sbr.rel (0) target = $region41
    $region40: #{tpu_custom_call.1} parent=1 // pred_region
      %85 = dma.done [#allocation9], 512
    $region41: #{tpu_custom_call.1} parent=1 // pred_fallthru
      _
    %v86 = vld [vmem:[#allocation7] sm:$0xff]
    %v87 = vld [vmem:[#allocation7 + $0x8] sm:$0xff]
    %v88 = vld [vmem:[#allocation7 + $0x10] sm:$0xff]
    %v89 = vld [vmem:[#allocation7 + $0x18] sm:$0xff]
    %v90 = vld [vmem:[#allocation7 + $0x20] sm:$0xff]
    %v91 = vld [vmem:[#allocation7 + $0x28] sm:$0xff]
    %v92 = vld [vmem:[#allocation7 + $0x30] sm:$0xff]
    %v93 = vld [vmem:[#allocation7 + $0x38] sm:$0xff]
    %v94 = vld [vmem:[%s3] sm:$0x1]
    %v95 = vld [vmem:[#allocation8] sm:$0xff]
    %v96 = vld [vmem:[#allocation8 + $0x8] sm:$0xff]
    %v97 = vld [vmem:[#allocation8 + $0x10] sm:$0xff]
    %v98 = vld [vmem:[#allocation8 + $0x18] sm:$0xff]
    %v99 = vld [vmem:[%s5] sm:$0x1]
    %v100 = vld [vmem:[#allocation5] sm:$0x1]
    %v101 = vld [vmem:[#allocation2] sm:$0x1]
    %v102 = vmax.f32 %v101, 0.0
    %v104 = vperm.slane %v100, 0
    %105 = vrot.lane.b32.xlu0 %v104, 32
    %v106 = vpop.permute.xlu0 %105
    %vm108 = vcmask 261120
    %v109 = vsel %vm108, %v102, %v106
    %vm110 = vcmask 523264
    %v112 = vsel %vm110, %v109, 0
    %114 = vmatpush.msra.mxu0 0.0
    %115 = vmatpush.msra.mxu0 0.0
    %116 = vmatpush.msra.mxu0 0.0
    %117 = vmatpush.msra.mxu0 0.0
    %118 = vmatpush.msra.mxu0 0.0
    %119 = vmatpush.msra.mxu0 0.0
    %120 = vmatpush.msra.mxu0 0.0
    %121 = vmatpush.msra.mxu0 0.0
    %122 = vmatpush.msra.mxu0 %v93
    %123 = vmatpush.msra.mxu0 %v92
    %124 = vmatpush.msra.mxu0 %v91
    %125 = vmatpush.msra.mxu0 %v90
    %126 = vmatpush.msra.mxu0 %v89
    %127 = vmatpush.msra.mxu0 %v88
    %128 = vmatpush.msra.mxu0 %v87
    %129 = vmatpush.msra.mxu0 %v86
    %130 = vmatmul.f32.gmra.mxu0 %v112
    %v131 = vpop.f32.mrf.mxu0
    %v132 = vadd.f32 %v94, %v131
    %133 = vdwg.mxu0
    %v134 = vxor.u32 %v132, 2147483648
    %v135 = vmul.f32 %v134, 1.442695
    %v136 = vpow.pop %v135
    %v137 = vadd.f32 %v136, 1.0
    %v138 = vrcp.pop %v137
    %v139 = vmul.f32 %v137, %v138
    %v140 = vsub.f32 1.0, %v139
    %v141 = vmul.f32 %v138, %v140
    %v142 = vadd.f32 %v138, %v141
    %vm143 = vweird.f32 %v137
    %vm144 = vweird.f32 %v138
    %vm145 = vmor %vm143, %vm144
    %v146 = vsel %vm145, %v138, %v142
    %v147 = vand.u32 2147483647, %v137
    %vm148 = vcmp.eq.f32.partialorder %v147, 8.507059e+37
    %v149 = vand.u32 %v137, 2147483648
    %v150 = vor.u32 1.1754944e-38, %v149
    %v151 = vsel %vm148, %v150, %v146
    %v152 = vmul.f32 1.0, %v151
    %154 = vrot.lane.b32.xlu0 %v132, 32
    %v155 = vpop.permute.xlu0 %154
    %v157 = vmul.f32 %v152, %v155
    %159 = vrot.lane.b32.xlu0 %v157, 64
    %v160 = vpop.permute.xlu0 %159
    %v162 = vadd.f32 %v132, %v160
    %v163 = vtanh.pop %v162
    %v164 = vsub.f32 1.0, %v152
    %166 = vrot.lane.b32.xlu0 %v163, 96
    %v167 = vpop.permute.xlu0 %166
    %v169 = vmul.f32 %v164, %v167
    %v170 = vmul.f32 %v152, %v106
    %v171 = vadd.f32 %v169, %v170
    %173 = vrot.lane.b32.xlu0 %v171, 96
    %v174 = vpop.permute.xlu0 %173
    %v175 = vsel %vm108, %v174, 0
    %177 = vmatpush.msra.mxu0 0.0
    %178 = vmatpush.msra.mxu0 0.0
    %179 = vmatpush.msra.mxu0 0.0
    %180 = vmatpush.msra.mxu0 0.0
    %181 = vmatpush.msra.mxu0 0.0
    %182 = vmatpush.msra.mxu0 0.0
    %183 = vmatpush.msra.mxu0 0.0
    %184 = vmatpush.msra.mxu0 0.0
    %185 = vmatpush.msra.mxu0 0.0
    %186 = vmatpush.msra.mxu0 0.0
    %187 = vmatpush.msra.mxu0 0.0
    %188 = vmatpush.msra.mxu0 0.0
    %189 = vmatpush.msra.mxu0 %v98
    %190 = vmatpush.msra.mxu0 %v97
    %191 = vmatpush.msra.mxu0 %v96
    %192 = vmatpush.msra.mxu0 %v95
    %193 = vmatmul.f32.gmra.mxu0 %v175
    %v194 = vpop.f32.mrf.mxu0
    %v195 = vadd.f32 %v99, %v194
    %196 = vdwg.mxu0
    %vm197 = vcmask 1040384
    %v198 = vsel %vm197, %v195, -inf
    %199 = vmax.xlane.f32.xlu0 %v198
    %v200 = vpop.xlane.xlu0 %199
    %v201 = vsub.f32 %v195, %v200
    %v202 = vmul.f32 %v201, 1.442695
    %v203 = vpow.pop %v202
    %v204 = vsel %vm197, %v203, 0.0
    %205 = vadd.xlane.f32.xlu0 %v204
    %v206 = vpop.xlane.xlu0 %205
    %v207 = vlog2.pop %v206
    %v208 = vmul.f32 %v207, 0.6931472
    %v209 = vadd.f32 %v208, %v200
    %v210 = vsub.f32 %v195, %v209
    %v211 = vld [vmem:[#allocation2 + $0x1] sm:$0x1]
    %v212 = vmax.f32 %v211, 0.0
    %v213 = vsel %vm108, %v212, %v171
    %v215 = vsel %vm110, %v213, 0
    %217 = vmatpush.msra.mxu0 0.0
    %218 = vmatpush.msra.mxu0 0.0
    %219 = vmatpush.msra.mxu0 0.0
    %220 = vmatpush.msra.mxu0 0.0
    %221 = vmatpush.msra.mxu0 0.0
    %222 = vmatpush.msra.mxu0 0.0
    %223 = vmatpush.msra.mxu0 0.0
    %224 = vmatpush.msra.mxu0 0.0
    %225 = vmatpush.msra.mxu0 %v93
    %226 = vmatpush.msra.mxu0 %v92
    %227 = vmatpush.msra.mxu0 %v91
    %228 = vmatpush.msra.mxu0 %v90
    %229 = vmatpush.msra.mxu0 %v89
    %230 = vmatpush.msra.mxu0 %v88
    %231 = vmatpush.msra.mxu0 %v87
    %232 = vmatpush.msra.mxu0 %v86
    %233 = vmatmul.f32.gmra.mxu0 %v215
    %v234 = vpop.f32.mrf.mxu0
    %v235 = vadd.f32 %v94, %v234
    %236 = vdwg.mxu0
    %v237 = vxor.u32 %v235, 2147483648
    %v238 = vmul.f32 %v237, 1.442695
    %v239 = vpow.pop %v238
    %v240 = vadd.f32 %v239, 1.0
    %v241 = vrcp.pop %v240
    %v242 = vmul.f32 %v240, %v241
    %v243 = vsub.f32 1.0, %v242
    %v244 = vmul.f32 %v241, %v243
    %v245 = vadd.f32 %v241, %v244
    %vm246 = vweird.f32 %v240
    %vm247 = vweird.f32 %v241
    %vm248 = vmor %vm246, %vm247
    %v249 = vsel %vm248, %v241, %v245
    %v250 = vand.u32 2147483647, %v240
    %vm251 = vcmp.eq.f32.partialorder %v250, 8.507059e+37
    %v252 = vand.u32 %v240, 2147483648
    %v253 = vor.u32 1.1754944e-38, %v252
    %v254 = vsel %vm251, %v253, %v249
    %v255 = vmul.f32 1.0, %v254
    %257 = vrot.lane.b32.xlu0 %v235, 32
    %v258 = vpop.permute.xlu0 %257
    %v260 = vmul.f32 %v255, %v258
    %262 = vrot.lane.b32.xlu0 %v260, 64
    %v263 = vpop.permute.xlu0 %262
    %v265 = vadd.f32 %v235, %v263
    %v266 = vtanh.pop %v265
    %v267 = vsub.f32 1.0, %v255
    %269 = vrot.lane.b32.xlu0 %v266, 96
    %v270 = vpop.permute.xlu0 %269
    %v272 = vmul.f32 %v267, %v270
    %v273 = vmul.f32 %v255, %v171
    %v274 = vadd.f32 %v272, %v273
    %276 = vrot.lane.b32.xlu0 %v274, 96
    %v277 = vpop.permute.xlu0 %276
    %v278 = vsel %vm108, %v277, 0
    %280 = vmatpush.msra.mxu0 0.0
    %281 = vmatpush.msra.mxu0 0.0
    %282 = vmatpush.msra.mxu0 0.0
    %283 = vmatpush.msra.mxu0 0.0
    %284 = vmatpush.msra.mxu0 0.0
    %285 = vmatpush.msra.mxu0 0.0
    %286 = vmatpush.msra.mxu0 0.0
    %287 = vmatpush.msra.mxu0 0.0
    %288 = vmatpush.msra.mxu0 0.0
    %289 = vmatpush.msra.mxu0 0.0
    %290 = vmatpush.msra.mxu0 0.0
    %291 = vmatpush.msra.mxu0 0.0
    %292 = vmatpush.msra.mxu0 %v98
    %293 = vmatpush.msra.mxu0 %v97
    %294 = vmatpush.msra.mxu0 %v96
    %295 = vmatpush.msra.mxu0 %v95
    %296 = vmatmul.f32.gmra.mxu0 %v278
    %v297 = vpop.f32.mrf.mxu0
    %v298 = vadd.f32 %v99, %v297
    %299 = vdwg.mxu0
    %v300 = vsel %vm197, %v298, -inf
    %301 = vmax.xlane.f32.xlu0 %v300
    %v302 = vpop.xlane.xlu0 %301
    %v303 = vsub.f32 %v298, %v302
    %v304 = vmul.f32 %v303, 1.442695
    %v305 = vpow.pop %v304
    %v306 = vsel %vm197, %v305, 0.0
    %307 = vadd.xlane.f32.xlu0 %v306
    %v308 = vpop.xlane.xlu0 %307
    %v309 = vlog2.pop %v308
    %v310 = vmul.f32 %v309, 0.6931472
    %v311 = vadd.f32 %v310, %v302
    %v312 = vsub.f32 %v298, %v311
    %v313 = vld [vmem:[#allocation2 + $0x2] sm:$0x1]
    %v314 = vmax.f32 %v313, 0.0
    %v315 = vsel %vm108, %v314, %v274
    %v317 = vsel %vm110, %v315, 0
    %319 = vmatpush.msra.mxu0 0.0
    %320 = vmatpush.msra.mxu0 0.0
    %321 = vmatpush.msra.mxu0 0.0
    %322 = vmatpush.msra.mxu0 0.0
    %323 = vmatpush.msra.mxu0 0.0
    %324 = vmatpush.msra.mxu0 0.0
    %325 = vmatpush.msra.mxu0 0.0
    %326 = vmatpush.msra.mxu0 0.0
    %327 = vmatpush.msra.mxu0 %v93
    %328 = vmatpush.msra.mxu0 %v92
    %329 = vmatpush.msra.mxu0 %v91
    %330 = vmatpush.msra.mxu0 %v90
    %331 = vmatpush.msra.mxu0 %v89
    %332 = vmatpush.msra.mxu0 %v88
    %333 = vmatpush.msra.mxu0 %v87
    %334 = vmatpush.msra.mxu0 %v86
    %335 = vmatmul.f32.gmra.mxu0 %v317
    %v336 = vpop.f32.mrf.mxu0
    %v337 = vadd.f32 %v94, %v336
    %338 = vdwg.mxu0
    %v339 = vxor.u32 %v337, 2147483648
    %v340 = vmul.f32 %v339, 1.442695
    %v341 = vpow.pop %v340
    %v342 = vadd.f32 %v341, 1.0
    %v343 = vrcp.pop %v342
    %v344 = vmul.f32 %v342, %v343
    %v345 = vsub.f32 1.0, %v344
    %v346 = vmul.f32 %v343, %v345
    %v347 = vadd.f32 %v343, %v346
    %vm348 = vweird.f32 %v342
    %vm349 = vweird.f32 %v343
    %vm350 = vmor %vm348, %vm349
    %v351 = vsel %vm350, %v343, %v347
    %v352 = vand.u32 2147483647, %v342
    %vm353 = vcmp.eq.f32.partialorder %v352, 8.507059e+37
    %v354 = vand.u32 %v342, 2147483648
    %v355 = vor.u32 1.1754944e-38, %v354
    %v356 = vsel %vm353, %v355, %v351
    %v357 = vmul.f32 1.0, %v356
    %359 = vrot.lane.b32.xlu0 %v337, 32
    %v360 = vpop.permute.xlu0 %359
    %v362 = vmul.f32 %v357, %v360
    %364 = vrot.lane.b32.xlu0 %v362, 64
    %v365 = vpop.permute.xlu0 %364
    %v367 = vadd.f32 %v337, %v365
    %v368 = vtanh.pop %v367
    %v369 = vsub.f32 1.0, %v357
    %371 = vrot.lane.b32.xlu0 %v368, 96
    %v372 = vpop.permute.xlu0 %371
    %v374 = vmul.f32 %v369, %v372
    %v375 = vmul.f32 %v357, %v274
    %v376 = vadd.f32 %v374, %v375
    %378 = vrot.lane.b32.xlu0 %v376, 96
    %v379 = vpop.permute.xlu0 %378
    %v380 = vsel %vm108, %v379, 0
    %382 = vmatpush.msra.mxu0 0.0
    %383 = vmatpush.msra.mxu0 0.0
    %384 = vmatpush.msra.mxu0 0.0
    %385 = vmatpush.msra.mxu0 0.0
    %386 = vmatpush.msra.mxu0 0.0
    %387 = vmatpush.msra.mxu0 0.0
    %388 = vmatpush.msra.mxu0 0.0
    %389 = vmatpush.msra.mxu0 0.0
    %390 = vmatpush.msra.mxu0 0.0
    %391 = vmatpush.msra.mxu0 0.0
    %392 = vmatpush.msra.mxu0 0.0
    %393 = vmatpush.msra.mxu0 0.0
    %394 = vmatpush.msra.mxu0 %v98
    %395 = vmatpush.msra.mxu0 %v97
    %396 = vmatpush.msra.mxu0 %v96
    %397 = vmatpush.msra.mxu0 %v95
    %398 = vmatmul.f32.gmra.mxu0 %v380
    %v399 = vpop.f32.mrf.mxu0
    %v400 = vadd.f32 %v99, %v399
    %401 = vdwg.mxu0
    %v402 = vsel %vm197, %v400, -inf
    %403 = vmax.xlane.f32.xlu0 %v402
    %v404 = vpop.xlane.xlu0 %403
    %v405 = vsub.f32 %v400, %v404
    %v406 = vmul.f32 %v405, 1.442695
    %v407 = vpow.pop %v406
    %v408 = vsel %vm197, %v407, 0.0
    %409 = vadd.xlane.f32.xlu0 %v408
    %v410 = vpop.xlane.xlu0 %409
    %v411 = vlog2.pop %v410
    %v412 = vmul.f32 %v411, 0.6931472
    %v413 = vadd.f32 %v412, %v404
    %v414 = vsub.f32 %v400, %v413
    %v415 = vld [vmem:[#allocation2 + $0x3] sm:$0x1]
    %v416 = vmax.f32 %v415, 0.0
    %v417 = vsel %vm108, %v416, %v376
    %v419 = vsel %vm110, %v417, 0
    %421 = vmatpush.msra.mxu0 0.0
    %422 = vmatpush.msra.mxu0 0.0
    %423 = vmatpush.msra.mxu0 0.0
    %424 = vmatpush.msra.mxu0 0.0
    %425 = vmatpush.msra.mxu0 0.0
    %426 = vmatpush.msra.mxu0 0.0
    %427 = vmatpush.msra.mxu0 0.0
    %428 = vmatpush.msra.mxu0 0.0
    %429 = vmatpush.msra.mxu0 %v93
    %430 = vmatpush.msra.mxu0 %v92
    %431 = vmatpush.msra.mxu0 %v91
    %432 = vmatpush.msra.mxu0 %v90
    %433 = vmatpush.msra.mxu0 %v89
    %434 = vmatpush.msra.mxu0 %v88
    %435 = vmatpush.msra.mxu0 %v87
    %436 = vmatpush.msra.mxu0 %v86
    %437 = vmatmul.f32.gmra.mxu0 %v419
    %v438 = vpop.f32.mrf.mxu0
    %v439 = vadd.f32 %v94, %v438
    %440 = vdwg.mxu0
    %v441 = vxor.u32 %v439, 2147483648
    %v442 = vmul.f32 %v441, 1.442695
    %v443 = vpow.pop %v442
    %v444 = vadd.f32 %v443, 1.0
    %v445 = vrcp.pop %v444
    %v446 = vmul.f32 %v444, %v445
    %v447 = vsub.f32 1.0, %v446
    %v448 = vmul.f32 %v445, %v447
    %v449 = vadd.f32 %v445, %v448
    %vm450 = vweird.f32 %v444
    %vm451 = vweird.f32 %v445
    %vm452 = vmor %vm450, %vm451
    %v453 = vsel %vm452, %v445, %v449
    %v454 = vand.u32 2147483647, %v444
    %vm455 = vcmp.eq.f32.partialorder %v454, 8.507059e+37
    %v456 = vand.u32 %v444, 2147483648
    %v457 = vor.u32 1.1754944e-38, %v456
    %v458 = vsel %vm455, %v457, %v453
    %v459 = vmul.f32 1.0, %v458
    %461 = vrot.lane.b32.xlu0 %v439, 32
    %v462 = vpop.permute.xlu0 %461
    %v464 = vmul.f32 %v459, %v462
    %466 = vrot.lane.b32.xlu0 %v464, 64
    %v467 = vpop.permute.xlu0 %466
    %v469 = vadd.f32 %v439, %v467
    %v470 = vtanh.pop %v469
    %v471 = vsub.f32 1.0, %v459
    %473 = vrot.lane.b32.xlu0 %v470, 96
    %v474 = vpop.permute.xlu0 %473
    %v476 = vmul.f32 %v471, %v474
    %v477 = vmul.f32 %v459, %v376
    %v478 = vadd.f32 %v476, %v477
    %480 = vrot.lane.b32.xlu0 %v478, 96
    %v481 = vpop.permute.xlu0 %480
    %v482 = vsel %vm108, %v481, 0
    %484 = vmatpush.msra.mxu0 0.0
    %485 = vmatpush.msra.mxu0 0.0
    %486 = vmatpush.msra.mxu0 0.0
    %487 = vmatpush.msra.mxu0 0.0
    %488 = vmatpush.msra.mxu0 0.0
    %489 = vmatpush.msra.mxu0 0.0
    %490 = vmatpush.msra.mxu0 0.0
    %491 = vmatpush.msra.mxu0 0.0
    %492 = vmatpush.msra.mxu0 0.0
    %493 = vmatpush.msra.mxu0 0.0
    %494 = vmatpush.msra.mxu0 0.0
    %495 = vmatpush.msra.mxu0 0.0
    %496 = vmatpush.msra.mxu0 %v98
    %497 = vmatpush.msra.mxu0 %v97
    %498 = vmatpush.msra.mxu0 %v96
    %499 = vmatpush.msra.mxu0 %v95
    %500 = vmatmul.f32.gmra.mxu0 %v482
    %v501 = vpop.f32.mrf.mxu0
    %v502 = vadd.f32 %v99, %v501
    %503 = vdwg.mxu0
    %v504 = vsel %vm197, %v502, -inf
    %505 = vmax.xlane.f32.xlu0 %v504
    %v506 = vpop.xlane.xlu0 %505
    %v507 = vsub.f32 %v502, %v506
    %v508 = vmul.f32 %v507, 1.442695
    %v509 = vpow.pop %v508
    %v510 = vsel %vm197, %v509, 0.0
    %511 = vadd.xlane.f32.xlu0 %v510
    %v512 = vpop.xlane.xlu0 %511
    %v513 = vlog2.pop %v512
    %v514 = vmul.f32 %v513, 0.6931472
    %v515 = vadd.f32 %v514, %v506
    %v516 = vsub.f32 %v502, %v515
    %v517 = vld [vmem:[#allocation2 + $0x4] sm:$0x1]
    %v518 = vmax.f32 %v517, 0.0
    %v519 = vsel %vm108, %v518, %v478
    %v521 = vsel %vm110, %v519, 0
    %523 = vmatpush.msra.mxu0 0.0
    %524 = vmatpush.msra.mxu0 0.0
    %525 = vmatpush.msra.mxu0 0.0
    %526 = vmatpush.msra.mxu0 0.0
    %527 = vmatpush.msra.mxu0 0.0
    %528 = vmatpush.msra.mxu0 0.0
    %529 = vmatpush.msra.mxu0 0.0
    %530 = vmatpush.msra.mxu0 0.0
    %531 = vmatpush.msra.mxu0 %v93
    %532 = vmatpush.msra.mxu0 %v92
    %533 = vmatpush.msra.mxu0 %v91
    %534 = vmatpush.msra.mxu0 %v90
    %535 = vmatpush.msra.mxu0 %v89
    %536 = vmatpush.msra.mxu0 %v88
    %537 = vmatpush.msra.mxu0 %v87
    %538 = vmatpush.msra.mxu0 %v86
    %539 = vmatmul.f32.gmra.mxu0 %v521
    %v540 = vpop.f32.mrf.mxu0
    %v541 = vadd.f32 %v94, %v540
    %542 = vdwg.mxu0
    %v543 = vxor.u32 %v541, 2147483648
    %v544 = vmul.f32 %v543, 1.442695
    %v545 = vpow.pop %v544
    %v546 = vadd.f32 %v545, 1.0
    %v547 = vrcp.pop %v546
    %v548 = vmul.f32 %v546, %v547
    %v549 = vsub.f32 1.0, %v548
    %v550 = vmul.f32 %v547, %v549
    %v551 = vadd.f32 %v547, %v550
    %vm552 = vweird.f32 %v546
    %vm553 = vweird.f32 %v547
    %vm554 = vmor %vm552, %vm553
    %v555 = vsel %vm554, %v547, %v551
    %v556 = vand.u32 2147483647, %v546
    %vm557 = vcmp.eq.f32.partialorder %v556, 8.507059e+37
    %v558 = vand.u32 %v546, 2147483648
    %v559 = vor.u32 1.1754944e-38, %v558
    %v560 = vsel %vm557, %v559, %v555
    %v561 = vmul.f32 1.0, %v560
    %563 = vrot.lane.b32.xlu0 %v541, 32
    %v564 = vpop.permute.xlu0 %563
    %v566 = vmul.f32 %v561, %v564
    %568 = vrot.lane.b32.xlu0 %v566, 64
    %v569 = vpop.permute.xlu0 %568
    %v571 = vadd.f32 %v541, %v569
    %v572 = vtanh.pop %v571
    %v573 = vsub.f32 1.0, %v561
    %575 = vrot.lane.b32.xlu0 %v572, 96
    %v576 = vpop.permute.xlu0 %575
    %v578 = vmul.f32 %v573, %v576
    %v579 = vmul.f32 %v561, %v478
    %v580 = vadd.f32 %v578, %v579
    %582 = vrot.lane.b32.xlu0 %v580, 96
    %v583 = vpop.permute.xlu0 %582
    %v584 = vsel %vm108, %v583, 0
    %586 = vmatpush.msra.mxu0 0.0
    %587 = vmatpush.msra.mxu0 0.0
    %588 = vmatpush.msra.mxu0 0.0
    %589 = vmatpush.msra.mxu0 0.0
    %590 = vmatpush.msra.mxu0 0.0
    %591 = vmatpush.msra.mxu0 0.0
    %592 = vmatpush.msra.mxu0 0.0
    %593 = vmatpush.msra.mxu0 0.0
    %594 = vmatpush.msra.mxu0 0.0
    %595 = vmatpush.msra.mxu0 0.0
    %596 = vmatpush.msra.mxu0 0.0
    %597 = vmatpush.msra.mxu0 0.0
    %598 = vmatpush.msra.mxu0 %v98
    %599 = vmatpush.msra.mxu0 %v97
    %600 = vmatpush.msra.mxu0 %v96
    %601 = vmatpush.msra.mxu0 %v95
    %602 = vmatmul.f32.gmra.mxu0 %v584
    %v603 = vpop.f32.mrf.mxu0
    %v604 = vadd.f32 %v99, %v603
    %605 = vdwg.mxu0
    %v606 = vsel %vm197, %v604, -inf
    %607 = vmax.xlane.f32.xlu0 %v606
    %v608 = vpop.xlane.xlu0 %607
    %v609 = vsub.f32 %v604, %v608
    %v610 = vmul.f32 %v609, 1.442695
    %v611 = vpow.pop %v610
    %v612 = vsel %vm197, %v611, 0.0
    %613 = vadd.xlane.f32.xlu0 %v612
    %v614 = vpop.xlane.xlu0 %613
    %v615 = vlog2.pop %v614
    %v616 = vmul.f32 %v615, 0.6931472
    %v617 = vadd.f32 %v616, %v608
    %v618 = vsub.f32 %v604, %v617
    %v619 = vld [vmem:[#allocation2 + $0x5] sm:$0x1]
    %v620 = vmax.f32 %v619, 0.0
    %v621 = vsel %vm108, %v620, %v580
    %v623 = vsel %vm110, %v621, 0
    %625 = vmatpush.msra.mxu0 0.0
    %626 = vmatpush.msra.mxu0 0.0
    %627 = vmatpush.msra.mxu0 0.0
    %628 = vmatpush.msra.mxu0 0.0
    %629 = vmatpush.msra.mxu0 0.0
    %630 = vmatpush.msra.mxu0 0.0
    %631 = vmatpush.msra.mxu0 0.0
    %632 = vmatpush.msra.mxu0 0.0
    %633 = vmatpush.msra.mxu0 %v93
    %634 = vmatpush.msra.mxu0 %v92
    %635 = vmatpush.msra.mxu0 %v91
    %636 = vmatpush.msra.mxu0 %v90
    %637 = vmatpush.msra.mxu0 %v89
    %638 = vmatpush.msra.mxu0 %v88
    %639 = vmatpush.msra.mxu0 %v87
    %640 = vmatpush.msra.mxu0 %v86
    %641 = vmatmul.f32.gmra.mxu0 %v623
    %v642 = vpop.f32.mrf.mxu0
    %v643 = vadd.f32 %v94, %v642
    %644 = vdwg.mxu0
    %v645 = vxor.u32 %v643, 2147483648
    %v646 = vmul.f32 %v645, 1.442695
    %v647 = vpow.pop %v646
    %v648 = vadd.f32 %v647, 1.0
    %v649 = vrcp.pop %v648
    %v650 = vmul.f32 %v648, %v649
    %v651 = vsub.f32 1.0, %v650
    %v652 = vmul.f32 %v649, %v651
    %v653 = vadd.f32 %v649, %v652
    %vm654 = vweird.f32 %v648
    %vm655 = vweird.f32 %v649
    %vm656 = vmor %vm654, %vm655
    %v657 = vsel %vm656, %v649, %v653
    %v658 = vand.u32 2147483647, %v648
    %vm659 = vcmp.eq.f32.partialorder %v658, 8.507059e+37
    %v660 = vand.u32 %v648, 2147483648
    %v661 = vor.u32 1.1754944e-38, %v660
    %v662 = vsel %vm659, %v661, %v657
    %v663 = vmul.f32 1.0, %v662
    %665 = vrot.lane.b32.xlu0 %v643, 32
    %v666 = vpop.permute.xlu0 %665
    %v668 = vmul.f32 %v663, %v666
    %670 = vrot.lane.b32.xlu0 %v668, 64
    %v671 = vpop.permute.xlu0 %670
    %v673 = vadd.f32 %v643, %v671
    %v674 = vtanh.pop %v673
    %v675 = vsub.f32 1.0, %v663
    %677 = vrot.lane.b32.xlu0 %v674, 96
    %v678 = vpop.permute.xlu0 %677
    %v680 = vmul.f32 %v675, %v678
    %v681 = vmul.f32 %v663, %v580
    %v682 = vadd.f32 %v680, %v681
    %684 = vrot.lane.b32.xlu0 %v682, 96
    %v685 = vpop.permute.xlu0 %684
    %v686 = vsel %vm108, %v685, 0
    %688 = vmatpush.msra.mxu0 0.0
    %689 = vmatpush.msra.mxu0 0.0
    %690 = vmatpush.msra.mxu0 0.0
    %691 = vmatpush.msra.mxu0 0.0
    %692 = vmatpush.msra.mxu0 0.0
    %693 = vmatpush.msra.mxu0 0.0
    %694 = vmatpush.msra.mxu0 0.0
    %695 = vmatpush.msra.mxu0 0.0
    %696 = vmatpush.msra.mxu0 0.0
    %697 = vmatpush.msra.mxu0 0.0
    %698 = vmatpush.msra.mxu0 0.0
    %699 = vmatpush.msra.mxu0 0.0
    %700 = vmatpush.msra.mxu0 %v98
    %701 = vmatpush.msra.mxu0 %v97
    %702 = vmatpush.msra.mxu0 %v96
    %703 = vmatpush.msra.mxu0 %v95
    %704 = vmatmul.f32.gmra.mxu0 %v686
    %v705 = vpop.f32.mrf.mxu0
    %v706 = vadd.f32 %v99, %v705
    %707 = vdwg.mxu0
    %v708 = vsel %vm197, %v706, -inf
    %709 = vmax.xlane.f32.xlu0 %v708
    %v710 = vpop.xlane.xlu0 %709
    %v711 = vsub.f32 %v706, %v710
    %v712 = vmul.f32 %v711, 1.442695
    %v713 = vpow.pop %v712
    %v714 = vsel %vm197, %v713, 0.0
    %715 = vadd.xlane.f32.xlu0 %v714
    %v716 = vpop.xlane.xlu0 %715
    %v717 = vlog2.pop %v716
    %v718 = vmul.f32 %v717, 0.6931472
    %v719 = vadd.f32 %v718, %v710
    %v720 = vsub.f32 %v706, %v719
    %v721 = vld [vmem:[#allocation2 + $0x6] sm:$0x1]
    %v722 = vmax.f32 %v721, 0.0
    %v723 = vsel %vm108, %v722, %v682
    %v725 = vsel %vm110, %v723, 0
    %727 = vmatpush.msra.mxu0 0.0
    %728 = vmatpush.msra.mxu0 0.0
    %729 = vmatpush.msra.mxu0 0.0
    %730 = vmatpush.msra.mxu0 0.0
    %731 = vmatpush.msra.mxu0 0.0
    %732 = vmatpush.msra.mxu0 0.0
    %733 = vmatpush.msra.mxu0 0.0
    %734 = vmatpush.msra.mxu0 0.0
    %735 = vmatpush.msra.mxu0 %v93
    %736 = vmatpush.msra.mxu0 %v92
    %737 = vmatpush.msra.mxu0 %v91
    %738 = vmatpush.msra.mxu0 %v90
    %739 = vmatpush.msra.mxu0 %v89
    %740 = vmatpush.msra.mxu0 %v88
    %741 = vmatpush.msra.mxu0 %v87
    %742 = vmatpush.msra.mxu0 %v86
    %743 = vmatmul.f32.gmra.mxu0 %v725
    %v744 = vpop.f32.mrf.mxu0
    %v745 = vadd.f32 %v94, %v744
    %746 = vdwg.mxu0
    %v747 = vxor.u32 %v745, 2147483648
    %v748 = vmul.f32 %v747, 1.442695
    %v749 = vpow.pop %v748
    %v750 = vadd.f32 %v749, 1.0
    %v751 = vrcp.pop %v750
    %v752 = vmul.f32 %v750, %v751
    %v753 = vsub.f32 1.0, %v752
    %v754 = vmul.f32 %v751, %v753
    %v755 = vadd.f32 %v751, %v754
    %vm756 = vweird.f32 %v750
    %vm757 = vweird.f32 %v751
    %vm758 = vmor %vm756, %vm757
    %v759 = vsel %vm758, %v751, %v755
    %v760 = vand.u32 2147483647, %v750
    %vm761 = vcmp.eq.f32.partialorder %v760, 8.507059e+37
    %v762 = vand.u32 %v750, 2147483648
    %v763 = vor.u32 1.1754944e-38, %v762
    %v764 = vsel %vm761, %v763, %v759
    %v765 = vmul.f32 1.0, %v764
    %767 = vrot.lane.b32.xlu0 %v745, 32
    %v768 = vpop.permute.xlu0 %767
    %v770 = vmul.f32 %v765, %v768
    %772 = vrot.lane.b32.xlu0 %v770, 64
    %v773 = vpop.permute.xlu0 %772
    %v775 = vadd.f32 %v745, %v773
    %v776 = vtanh.pop %v775
    %v777 = vsub.f32 1.0, %v765
    %779 = vrot.lane.b32.xlu0 %v776, 96
    %v780 = vpop.permute.xlu0 %779
    %v782 = vmul.f32 %v777, %v780
    %v783 = vmul.f32 %v765, %v682
    %v784 = vadd.f32 %v782, %v783
    %786 = vrot.lane.b32.xlu0 %v784, 96
    %v787 = vpop.permute.xlu0 %786
    %v788 = vsel %vm108, %v787, 0
    %790 = vmatpush.msra.mxu0 0.0
    %791 = vmatpush.msra.mxu0 0.0
    %792 = vmatpush.msra.mxu0 0.0
    %793 = vmatpush.msra.mxu0 0.0
    %794 = vmatpush.msra.mxu0 0.0
    %795 = vmatpush.msra.mxu0 0.0
    %796 = vmatpush.msra.mxu0 0.0
    %797 = vmatpush.msra.mxu0 0.0
    %798 = vmatpush.msra.mxu0 0.0
    %799 = vmatpush.msra.mxu0 0.0
    %800 = vmatpush.msra.mxu0 0.0
    %801 = vmatpush.msra.mxu0 0.0
    %802 = vmatpush.msra.mxu0 %v98
    %803 = vmatpush.msra.mxu0 %v97
    %804 = vmatpush.msra.mxu0 %v96
    %805 = vmatpush.msra.mxu0 %v95
    %806 = vmatmul.f32.gmra.mxu0 %v788
    %v807 = vpop.f32.mrf.mxu0
    %v808 = vadd.f32 %v99, %v807
    %809 = vdwg.mxu0
    %v810 = vsel %vm197, %v808, -inf
    %811 = vmax.xlane.f32.xlu0 %v810
    %v812 = vpop.xlane.xlu0 %811
    %v813 = vsub.f32 %v808, %v812
    %v814 = vmul.f32 %v813, 1.442695
    %v815 = vpow.pop %v814
    %v816 = vsel %vm197, %v815, 0.0
    %817 = vadd.xlane.f32.xlu0 %v816
    %v818 = vpop.xlane.xlu0 %817
    %v819 = vlog2.pop %v818
    %v820 = vmul.f32 %v819, 0.6931472
    %v821 = vadd.f32 %v820, %v812
    %v822 = vsub.f32 %v808, %v821
    %v823 = vld [vmem:[#allocation2 + $0x7] sm:$0x1]
    %v824 = vmax.f32 %v823, 0.0
    %v825 = vsel %vm108, %v824, %v784
    %v827 = vsel %vm110, %v825, 0
    %829 = vmatpush.msra.mxu0 0.0
    %830 = vmatpush.msra.mxu0 0.0
    %831 = vmatpush.msra.mxu0 0.0
    %832 = vmatpush.msra.mxu0 0.0
    %833 = vmatpush.msra.mxu0 0.0
    %834 = vmatpush.msra.mxu0 0.0
    %835 = vmatpush.msra.mxu0 0.0
    %836 = vmatpush.msra.mxu0 0.0
    %837 = vmatpush.msra.mxu0 %v93
    %838 = vmatpush.msra.mxu0 %v92
    %839 = vmatpush.msra.mxu0 %v91
    %840 = vmatpush.msra.mxu0 %v90
    %841 = vmatpush.msra.mxu0 %v89
    %842 = vmatpush.msra.mxu0 %v88
    %843 = vmatpush.msra.mxu0 %v87
    %844 = vmatpush.msra.mxu0 %v86
    %845 = vmatmul.f32.gmra.mxu0 %v827
    %v846 = vpop.f32.mrf.mxu0
    %v847 = vadd.f32 %v94, %v846
    %848 = vdwg.mxu0
    %v849 = vxor.u32 %v847, 2147483648
    %v850 = vmul.f32 %v849, 1.442695
    %v851 = vpow.pop %v850
    %v852 = vadd.f32 %v851, 1.0
    %v853 = vrcp.pop %v852
    %v854 = vmul.f32 %v852, %v853
    %v855 = vsub.f32 1.0, %v854
    %v856 = vmul.f32 %v853, %v855
    %v857 = vadd.f32 %v853, %v856
    %vm858 = vweird.f32 %v852
    %vm859 = vweird.f32 %v853
    %vm860 = vmor %vm858, %vm859
    %v861 = vsel %vm860, %v853, %v857
    %v862 = vand.u32 2147483647, %v852
    %vm863 = vcmp.eq.f32.partialorder %v862, 8.507059e+37
    %v864 = vand.u32 %v852, 2147483648
    %v865 = vor.u32 1.1754944e-38, %v864
    %v866 = vsel %vm863, %v865, %v861
    %v867 = vmul.f32 1.0, %v866
    %869 = vrot.lane.b32.xlu0 %v847, 32
    %v870 = vpop.permute.xlu0 %869
    %v872 = vmul.f32 %v867, %v870
    %874 = vrot.lane.b32.xlu0 %v872, 64
    %v875 = vpop.permute.xlu0 %874
    %v877 = vadd.f32 %v847, %v875
    %v878 = vtanh.pop %v877
    %v879 = vsub.f32 1.0, %v867
    %881 = vrot.lane.b32.xlu0 %v878, 96
    %v882 = vpop.permute.xlu0 %881
    %v884 = vmul.f32 %v879, %v882
    %v885 = vmul.f32 %v867, %v784
    %v886 = vadd.f32 %v884, %v885
    %888 = vrot.lane.b32.xlu0 %v886, 96
    %v889 = vpop.permute.xlu0 %888
    %v890 = vsel %vm108, %v889, 0
    %892 = vmatpush.msra.mxu0 0.0
    %893 = vmatpush.msra.mxu0 0.0
    %894 = vmatpush.msra.mxu0 0.0
    %895 = vmatpush.msra.mxu0 0.0
    %896 = vmatpush.msra.mxu0 0.0
    %897 = vmatpush.msra.mxu0 0.0
    %898 = vmatpush.msra.mxu0 0.0
    %899 = vmatpush.msra.mxu0 0.0
    %900 = vmatpush.msra.mxu0 0.0
    %901 = vmatpush.msra.mxu0 0.0
    %902 = vmatpush.msra.mxu0 0.0
    %903 = vmatpush.msra.mxu0 0.0
    %904 = vmatpush.msra.mxu0 %v98
    %905 = vmatpush.msra.mxu0 %v97
    %906 = vmatpush.msra.mxu0 %v96
    %907 = vmatpush.msra.mxu0 %v95
    %908 = vmatmul.f32.gmra.mxu0 %v890
    %v909 = vpop.f32.mrf.mxu0
    %v910 = vadd.f32 %v99, %v909
    %911 = vdwg.mxu0
    %v912 = vsel %vm197, %v910, -inf
    %913 = vmax.xlane.f32.xlu0 %v912
    %v914 = vpop.xlane.xlu0 %913
    %v915 = vsub.f32 %v910, %v914
    %v916 = vmul.f32 %v915, 1.442695
    %v917 = vpow.pop %v916
    %v918 = vsel %vm197, %v917, 0.0
    %919 = vadd.xlane.f32.xlu0 %v918
    %v920 = vpop.xlane.xlu0 %919
    %v921 = vlog2.pop %v920
    %v922 = vmul.f32 %v921, 0.6931472
    %v923 = vadd.f32 %v922, %v914
    %v924 = vsub.f32 %v910, %v923
    %v926 = vrot.slane %v312, 7
    %v929 = vrot.slane %v414, 6
    %v932 = vrot.slane %v516, 5
    %v935 = vrot.slane %v618, 4
    %v938 = vrot.slane %v720, 3
    %v941 = vrot.slane %v822, 2
    %v944 = vrot.slane %v924, 1
    %v946 = vsel %vm197, %v210, %v926
    %vm947 = vcmask 1041408
    %v948 = vsel %vm947, %v946, %v929
    %vm949 = vcmask 1042432
    %v950 = vsel %vm949, %v948, %v932
    %vm951 = vcmask 1043456
    %v952 = vsel %vm951, %v950, %v935
    %vm953 = vcmask 1044480
    %v954 = vsel %vm953, %v952, %v938
    %vm955 = vcmask 1045504
    %v956 = vsel %vm955, %v954, %v941
    %vm957 = vcmask 1046528
    %v958 = vsel %vm957, %v956, %v944
    %959 = vst [vmem:[#allocation10] sm:$0xff] %v958
    %vm961 = vcmask 253952
    %962 = vst.msk [vmem:[#allocation11] sm:$0x1] %vm961, %v889
    // Predicated region
    $region42: #{tpu_custom_call.1} parent=1 // pred_check
      _
    $region43: #{tpu_custom_call.1} parent=1 // pred_check_branch
      %964 = sbr.rel (0) target = $region45
    $region44: #{tpu_custom_call.1} parent=1 // pred_region
      %966 = vsyncadd [#allocation4], 0
      %s968 = sshll.u32 [#allocation10], 4
      %s969 = int_to_ptr.vmem [resolvable:$true] %s968
      %s970 = sshll.u32 %s6, 4
      %s971 = int_to_ptr.hbm [resolvable:$true] %s970
      %973 = dma.vmem_to_hbm [thread:$0]  %s969, 128, %s971, [#allocation4]
    $region45: #{tpu_custom_call.1} parent=1 // pred_fallthru
      _
    // Predicated region
    $region46: #{tpu_custom_call.1} parent=1 // pred_check
      _
    $region47: #{tpu_custom_call.1} parent=1 // pred_check_branch
      %975 = sbr.rel (0) target = $region49
    $region48: #{tpu_custom_call.1} parent=1 // pred_region
      %977 = vsyncadd [#allocation12], 0
      %s979 = sshll.u32 [#allocation11], 4
      %s980 = int_to_ptr.vmem [resolvable:$true] %s979
      %s981 = sshll.u32 %s7, 4
      %s982 = int_to_ptr.hbm [resolvable:$true] %s981
      %984 = dma.vmem_to_hbm [thread:$0]  %s980, 16, %s982, [#allocation12]
    $region49: #{tpu_custom_call.1} parent=1 // pred_fallthru
      _
    // Predicated region
    $region50: #{tpu_custom_call.1} parent=1 // pred_check
      _
    $region51: #{tpu_custom_call.1} parent=1 // pred_check_branch
      %986 = sbr.rel (0) target = $region53
    $region52: #{tpu_custom_call.1} parent=1 // pred_region
      %988 = dma.done [#allocation4], 128
    $region53: #{tpu_custom_call.1} parent=1 // pred_fallthru
      _
    // Predicated region
    $region54: #{tpu_custom_call.1} parent=1 // pred_check
      _
    $region55: #{tpu_custom_call.1} parent=1 // pred_check_branch
      %990 = sbr.rel (0) target = $region57
    $region56: #{tpu_custom_call.1} parent=1 // pred_region
      %992 = dma.done [#allocation12], 16
    $region57: #{tpu_custom_call.1} parent=1 // pred_fallthru
      _
    %993 = vsyncpa [#allocation3], 1
    %994 = vsyncpa [#allocation6], 1
    %995 = vsyncpa [#allocation9], 1
    %996 = vsyncpa [#allocation4], 1
    %997 = vsyncpa [#allocation12], 1

</llo_original>
